<compile_context>
chip_gen: v7x
topology: tpu7x:2x2x1
jax: 0.10.0
libtpu: 0.0.40
codegen_flags: <defaults>
</compile_context>

<pallas_src>
import functools

import jax
import jax.numpy as jnp
from jax import lax
from jax.experimental import pallas as pl
from jax.experimental.pallas import tpu as pltpu


def _round_up(x, m):
    return ((x + m - 1) // m) * m


def _eltwise_dtype():
    """bf16 elementwise only on chips with bf16 VPU ALUs (v6e / v7x)."""
    try:
        kind = jax.devices()[0].device_kind.lower()
    except Exception:
        return jnp.float32
    if ("v6" in kind) or ("v7" in kind):
        return jnp.bfloat16
    return jnp.float32


# ----------------------------------------------------------------------------
# Pallas kernel: correlation volume -> MatchingNet (pointwise) -> DAP
# one (batch, pixel-tile) block per grid step; channel-major, pixels in lanes
# ----------------------------------------------------------------------------
def _mnet_dap_kernel(f1_ref, f2_ref,
                     w1a_ref, w1b_ref, b1_ref,
                     w2_ref, b2_ref,
                     w3_ref, wdap_ref, bdap_ref,
                     out_ref, cost_ref, *, elt_dtype):
    D = f2_ref.shape[1]

    f1 = f1_ref[0]                                                     # (C, t) bf16

    # conv1 on the f1 half of the correlation concat (BN scale + bias folded):
    # identical for every displacement, so compute it once per pixel tile.
    h1a = (jnp.dot(w1a_ref[...], f1, preferred_element_type=jnp.float32)
           + b1_ref[...]).astype(elt_dtype)                            # (c1, t)

    w1b = w1b_ref[...]                                                 # (c1, C) bf16
    w2 = w2_ref[...]                                                   # (c2, c1) bf16
    b2 = b2_ref[...].astype(elt_dtype)                                 # (c2, 1)
    w3 = w3_ref[...]                                                   # (1, c2) bf16

    def body(d, carry):
        f2d = f2_ref[0, d]                                             # (C, t) bf16
        # conv1 (f2 half) + ReLU
        h1 = jnp.maximum(
            jnp.dot(w1b, f2d, preferred_element_type=elt_dtype) + h1a, 0.0
        ).astype(jnp.bfloat16)                                         # (c1, t)
        # conv2 + ReLU
        h2 = jnp.maximum(
            jnp.dot(w2, h1, preferred_element_type=elt_dtype) + b2, 0.0
        ).astype(jnp.bfloat16)                                         # (c2, t)
        # conv3 -> single cost channel: MXU matmul (no cross-lane reduce)
        cost_ref[pl.ds(d, 1), :] = jnp.dot(
            w3, h2, preferred_element_type=jnp.float32)                # (1, t)
        return carry

    lax.fori_loop(0, D, body, 0)

    # displacement-aware projection: (D, D) @ (D, t) matmul + folded conv3 bias
    out = jnp.dot(wdap_ref[...], cost_ref[...],
                  preferred_element_type=jnp.float32) + bdap_ref[...]
    out_ref[0] = out.astype(out_ref.dtype)


def mnet_dap_level(f1cm, f2cm, params, *, tile):
    """f1cm: (B, C, hw_p) bf16, f2cm: (B, D, C, hw_p) bf16 -> cost (B, D, hw_p) f32."""
    w1, s1, b1, w2, s2, b2, w3, b3, wdap = params
    B, D, C, hw_p = f2cm.shape
    c1 = w1.shape[1]
    c2 = w2.shape[1]
    t = tile
    assert hw_p % t == 0

    # Fold BN scales into the conv weights (exact): relu(x@w*s + b) == relu(x@(w*s) + b).
    # Transpose weights so they are the small LHS of channel-major matmuls.
    # Fold conv3 bias through the linear, bias-free DAP (exact):
    #   wdap @ (cost + b3) == wdap @ cost + b3 * wdap.sum(axis=1)
    w1s = w1 * s1                                          # (2C, c1)
    w1aT = w1s[:C].T.astype(jnp.bfloat16)                  # (c1, C)   acts on f1 half
    w1bT = w1s[C:].T.astype(jnp.bfloat16)                  # (c1, C)   acts on sampled-f2 half
    b1c = b1.reshape(c1, 1).astype(jnp.float32)            # (c1, 1)
    w2T = (w2 * s2).T.astype(jnp.bfloat16)                 # (c2, c1)
    b2c = b2.reshape(c2, 1).astype(jnp.float32)            # (c2, 1)
    w3r = w3.astype(jnp.bfloat16)                          # (1, c2)
    wdapf = wdap.astype(jnp.float32)                       # (D, D)
    bdap = (b3[0, 0] * jnp.sum(wdap, axis=1, keepdims=True)).astype(jnp.float32)  # (D, 1)

    kernel = functools.partial(_mnet_dap_kernel, elt_dtype=_eltwise_dtype())

    out = pl.pallas_call(
        kernel,
        out_shape=jax.ShapeDtypeStruct((B, D, hw_p), jnp.float32),
        grid_spec=pltpu.PrefetchScalarGridSpec(
            num_scalar_prefetch=0,
            grid=(B, hw_p // t),
            in_specs=[
                pl.BlockSpec((1, C, t), lambda b, p: (b, 0, p)),
                pl.BlockSpec((1, D, C, t), lambda b, p: (b, 0, 0, p)),
                pl.BlockSpec((c1, C), lambda b, p: (0, 0)),
                pl.BlockSpec((c1, C), lambda b, p: (0, 0)),
                pl.BlockSpec((c1, 1), lambda b, p: (0, 0)),
                pl.BlockSpec((c2, c1), lambda b, p: (0, 0)),
                pl.BlockSpec((c2, 1), lambda b, p: (0, 0)),
                pl.BlockSpec((1, c2), lambda b, p: (0, 0)),
                pl.BlockSpec((D, D), lambda b, p: (0, 0)),
                pl.BlockSpec((D, 1), lambda b, p: (0, 0)),
            ],
            out_specs=pl.BlockSpec((1, D, t), lambda b, p: (b, 0, p)),
            scratch_shapes=[pltpu.VMEM((D, t), jnp.float32)],
        ),
        compiler_params=pltpu.CompilerParams(
            dimension_semantics=("parallel", "parallel")),
    )(f1cm, f2cm, w1aT, w1bT, b1c, w2T, b2c, w3r, wdapf, bdap)

    return out


# ----------------------------------------------------------------------------
# Plain-JAX glue: grid_sample (bilinear, align_corners=True, zeros padding).
# Takes f2 pixel coordinates directly and emits the sampled volume channel-major
# (B, D, C, P) already in the kernel dtype -- no extra HBM cast/pad passes over
# the D x feature-map sized tensor.
# ----------------------------------------------------------------------------
def bilinear_sample_cmajor(img, px, py, out_dtype=jnp.bfloat16):
    """img: (B,C,H,W); px, py: (B,D,P) pixel coords. Returns (B, D, C, P)."""
    B, C, H, W = img.shape
    img_cl = img.reshape(B, C, H * W)

    x0 = jnp.floor(px)
    y0 = jnp.floor(py)
    x1 = x0 + 1.0
    y1 = y0 + 1.0
    wx1 = px - x0
    wx0 = 1.0 - wx1
    wy1 = py - y0
    wy0 = 1.0 - wy1

    def corner(yi, xi, wgt):
        valid = (xi >= 0) & (xi <= W - 1) & (yi >= 0) & (yi <= H - 1)
        xc = jnp.clip(xi, 0, W - 1).astype(jnp.int32)
        yc = jnp.clip(yi, 0, H - 1).astype(jnp.int32)
        idx = yc * W + xc                                            # (B, D, P)
        g = jax.vmap(                                                # over batch
            jax.vmap(lambda im, ix: jnp.take(im, ix, axis=1),        # over displacement
                     in_axes=(None, 0)),
            in_axes=(0, 0))(img_cl, idx)                             # (B, D, C, P)
        w_eff = (wgt * valid.astype(wgt.dtype))[:, :, None, :]       # (B, D, 1, P)
        return g * w_eff

    out = (corner(y0, x0, wy0 * wx0) + corner(y0, x1, wy0 * wx1)
           + corner(y1, x0, wy1 * wx0) + corner(y1, x1, wy1 * wx1))
    return out.astype(out_dtype)


# ----------------------------------------------------------------------------
# CorrelationModule.forward (dap_type='separate', share=False)
# ----------------------------------------------------------------------------
def correlation_forward(fmap1, fmap2, coords, level_params, radius,
                        dap=True, mask_costs=(), tile_hw=1024):
    B, _, h, w = coords.shape
    hw = h * w
    r = radius
    n = 2 * r + 1
    D = n * n
    lin = jnp.linspace(-r, r, n, dtype=jnp.float32)
    # flat displacement d = du * n + dv; delta[du, dv] = (dx[du], dy[dv])
    dxf = jnp.repeat(lin, n)   # added to coords channel 0 (x)
    dyf = jnp.tile(lin, n)     # added to coords channel 1 (y)

    # Pixel tile: multiple of 128 lanes; VMEM use per tile is small so large
    # tiles fit every generation. Ensure >= 2 grid steps when B == 1 so both
    # v7x TensorCores stay fed.
    t = min(tile_hw, _round_up(hw, 128))
    if B == 1 and t >= 256 and _round_up(hw, t) // t < 2:
        t = max(128, _round_up(_round_up(hw, 128) // 2, 128))
    hw_p = _round_up(hw, t)

    cx = coords[:, 0].reshape(B, hw)
    cy = coords[:, 1].reshape(B, hw)
    if hw_p != hw:
        cx = jnp.pad(cx, ((0, 0), (0, hw_p - hw)))
        cy = jnp.pad(cy, ((0, 0), (0, hw_p - hw)))

    outs = []
    for i, (f1, f2) in enumerate(zip(fmap1, fmap2)):
        _, C, h1f, w1f = f1.shape     # torch code normalizes by f1's spatial dims
        _, _, h2f, w2f = f2.shape     # ...and samples f2 (align_corners=True)
        # normalize-with-f1 then unnormalize-with-f2 composes to a pure scale
        sx = (w2f - 1) / (w1f - 1)
        sy = (h2f - 1) / (h1f - 1)
        px = (cx[:, None, :] / (2.0 ** i) + dxf[None, :, None]) * sx   # (B, D, hw_p)
        py = (cy[:, None, :] / (2.0 ** i) + dyf[None, :, None]) * sy

        f2s = bilinear_sample_cmajor(f2, px, py)                       # (B, D, C, hw_p) bf16
        f1cm = f1.reshape(B, C, hw)
        if hw_p != hw:
            f1cm = jnp.pad(f1cm, ((0, 0), (0, 0), (0, hw_p - hw)))
        f1cm = f1cm.astype(jnp.bfloat16)

        p = list(level_params[i])
        if not dap:
            p[-1] = jnp.eye(D, dtype=jnp.float32)   # skip the (bias-free, linear) DAP
        cost = mnet_dap_level(f1cm, f2s, tuple(p), tile=t)             # (B, D, hw_p)

        if (i + 3) in mask_costs:
            # DAP is linear and bias-free, so zeroing after is identical to before.
            cost = jnp.zeros_like(cost)

        outs.append(cost[:, :, :hw].reshape(B, D, h, w))

    return jnp.concatenate(outs, axis=1)   # (B, levels*D, h, w)


# pure-JAX f32 reference of the fused kernel math (for a sanity check)
def _mnet_dap_ref(f1cm, f2cm, params):
    """f1cm: (B, C, hw) f32, f2cm: (B, D, C, hw) f32."""
    w1, s1, b1, w2, s2, b2, w3, b3, wdap = params
    B, D, C, hw = f2cm.shape
    f1 = jnp.transpose(f1cm, (0, 2, 1))                 # (B, hw, C)
    f2 = jnp.transpose(f2cm, (0, 1, 3, 2))              # (B, D, hw, C)
    x = jnp.concatenate(
        [jnp.broadcast_to(f1[:, None], (B, D, hw, C)), f2], axis=-1)
    h1 = jnp.maximum(x @ w1 * s1 + b1, 0.0)
    h2 = jnp.maximum(h1 @ w2 * s2 + b2, 0.0)
    cost = jnp.sum(h2 * w3[0], axis=-1) + b3[0, 0]       # (B, D, hw)
    return jnp.einsum('od,bdp->bop', wdap, cost)


def make_level_params(key, feature_dim, radius, c1=96, c2=64):
    D = (2 * radius + 1) ** 2
    k = jax.random.split(key, 7)
    w1 = jax.random.normal(k[0], (2 * feature_dim, c1), jnp.float32) / jnp.sqrt(2.0 * feature_dim)
    s1 = 1.0 + 0.05 * jax.random.normal(k[1], (1, c1), jnp.float32)
    b1 = 0.05 * jax.random.normal(k[2], (1, c1), jnp.float32)
    w2 = jax.random.normal(k[3], (c1, c2), jnp.float32) / jnp.sqrt(1.0 * c1)
    s2 = 1.0 + 0.05 * jax.random.normal(k[4], (1, c2), jnp.float32)
    b2 = 0.05 * jax.random.normal(k[5], (1, c2), jnp.float32)
    w3 = jax.random.normal(jax.random.fold_in(key, 7), (1, c2), jnp.float32) / jnp.sqrt(1.0 * c2)
    b3 = jnp.full((1, 1), 0.1, jnp.float32)
    # dap_init='identity' (+ small noise so the DAP path is exercised)
    wdap = jnp.eye(D, dtype=jnp.float32) + 0.02 * jax.random.normal(k[6], (D, D), jnp.float32)
    return (w1, s1, b1, w2, s2, b2, w3, b3, wdap)


if __name__ == "__main__":
    key = jax.random.PRNGKey(0)
    B, feature_dim, h, w = 2, 32, 16, 16
    levels, radius = 2, 2
    D = (2 * radius + 1) ** 2

    ks = jax.random.split(key, 8)
    # fmap1: every level at coords resolution (required by f1.view in torch code)
    fmap1 = [0.5 * jax.random.normal(ks[i], (B, feature_dim, h, w), jnp.float32)
             for i in range(levels)]
    # fmap2: pyramid, level i at (h >> i, w >> i)
    fmap2 = [0.5 * jax.random.normal(ks[2 + i], (B, feature_dim, h >> i, w >> i), jnp.float32)
             for i in range(levels)]
    # coords: pixel coordinates (channel 0 = x in [0, w-1], channel 1 = y in [0, h-1])
    coords = jnp.stack([
        jax.random.uniform(ks[4], (B, h, w), jnp.float32, 0.0, w - 1.0),
        jax.random.uniform(ks[5], (B, h, w), jnp.float32, 0.0, h - 1.0),
    ], axis=1)

    level_params = [make_level_params(jax.random.fold_in(ks[6], i), feature_dim, radius)
                    for i in range(levels)]

    fwd = jax.jit(functools.partial(correlation_forward, radius=radius,
                                    dap=True, mask_costs=()))
    out = jax.block_until_ready(fwd(fmap1, fmap2, coords, level_params))
    assert out.shape == (B, levels * D, h, w), out.shape

    # sanity check: fused kernel (bf16 operands / bf16-or-f32 elementwise, f32
    # MXU accumulation) vs an f32 pure-JAX reference for level 0
    n = 2 * radius + 1
    lin = jnp.linspace(-radius, radius, n, dtype=jnp.float32)
    dxf = jnp.repeat(lin, n)
    dyf = jnp.tile(lin, n)
    hw = h * w
    cx = coords[:, 0].reshape(B, hw)
    cy = coords[:, 1].reshape(B, hw)
    px = cx[:, None, :] + dxf[None, :, None]     # level 0: f1 and f2 same resolution
    py = cy[:, None, :] + dyf[None, :, None]
    f2s0 = bilinear_sample_cmajor(fmap2[0], px, py, out_dtype=jnp.float32)  # (B, D, C, hw)
    f1cm0 = fmap1[0].reshape(B, feature_dim, hw)
    ref0 = _mnet_dap_ref(f1cm0, f2s0, level_params[0]).reshape(B, D, h, w)
    got0 = out[:, :D]
    max_err = float(jnp.max(jnp.abs(got0 - ref0)))
    assert jnp.allclose(got0, ref0, atol=1e-1, rtol=1e-1), max_err

    print("KERNEL_OK")
</pallas_src>

<mosaic_0001>
module attributes {stable_mosaic.version = 11 : i64} {
  func.func @_mnet_dap_kernel(%arg0: i32, %arg1: i32, %arg2: memref<1x32x256xbf16, #tpu.memory_space<vmem>>, %arg3: memref<1x25x32x256xbf16, #tpu.memory_space<vmem>>, %arg4: memref<96x32xbf16, #tpu.memory_space<vmem>>, %arg5: memref<96x32xbf16, #tpu.memory_space<vmem>>, %arg6: memref<96x1xf32, #tpu.memory_space<vmem>>, %arg7: memref<64x96xbf16, #tpu.memory_space<vmem>>, %arg8: memref<64x1xf32, #tpu.memory_space<vmem>>, %arg9: memref<1x64xbf16, #tpu.memory_space<vmem>>, %arg10: memref<25x25xf32, #tpu.memory_space<vmem>>, %arg11: memref<25x1xf32, #tpu.memory_space<vmem>>, %arg12: memref<1x25x256xf32, #tpu.memory_space<vmem>>, %arg13: memref<25x256xf32, #tpu.memory_space<vmem>>) attributes {dimension_semantics = [#tpu.dimension_semantics<parallel>, #tpu.dimension_semantics<parallel>], iteration_bounds = array<i64: 2, 1>, scalar_prefetch = 0 : i64, scratch_operands = 1 : i64, tpu.core_type = #tpu.core_type<tc>, window_params = [{transform_indices = @transform_0, window_bounds = array<i64: 1, 32, 256>}, {transform_indices = @transform_1, window_bounds = array<i64: 1, 25, 32, 256>}, {pipeline_mode = #tpu.pipeline_mode<synchronous>, transform_indices = @transform_2, window_bounds = array<i64: 96, 32>}, {pipeline_mode = #tpu.pipeline_mode<synchronous>, transform_indices = @transform_3, window_bounds = array<i64: 96, 32>}, {pipeline_mode = #tpu.pipeline_mode<synchronous>, transform_indices = @transform_4, window_bounds = array<i64: 96, 1>}, {pipeline_mode = #tpu.pipeline_mode<synchronous>, transform_indices = @transform_5, window_bounds = array<i64: 64, 96>}, {pipeline_mode = #tpu.pipeline_mode<synchronous>, transform_indices = @transform_6, window_bounds = array<i64: 64, 1>}, {pipeline_mode = #tpu.pipeline_mode<synchronous>, transform_indices = @transform_7, window_bounds = array<i64: 1, 64>}, {pipeline_mode = #tpu.pipeline_mode<synchronous>, transform_indices = @transform_8, window_bounds = array<i64: 25, 25>}, {pipeline_mode = #tpu.pipeline_mode<synchronous>, transform_indices = @transform_9, window_bounds = array<i64: 25, 1>}, {transform_indices = @transform_10, window_bounds = array<i64: 1, 25, 256>}]} {
    %c0 = arith.constant 0 : index
    %c0_0 = arith.constant 0 : index
    %c0_1 = arith.constant 0 : index
    %0 = vector.load %arg2[%c0, %c0_0, %c0_1] : memref<1x32x256xbf16, #tpu.memory_space<vmem>>, vector<1x32x256xbf16>
    %1 = vector.shape_cast %0 : vector<1x32x256xbf16> to vector<32x256xbf16>
    %c0_2 = arith.constant 0 : index
    %c0_3 = arith.constant 0 : index
    %2 = vector.load %arg4[%c0_2, %c0_3] : memref<96x32xbf16, #tpu.memory_space<vmem>>, vector<96x32xbf16>
    %cst = arith.constant dense<0.000000e+00> : vector<96x256xf32>
    %3 = tpu.matmul %2, %1, %cst {dimension_numbers = #tpu.dot_dimension_numbers<[1], [0], [0], [1], [0, 0, 1, 1], [], []>} : vector<96x32xbf16>, vector<32x256xbf16>, vector<96x256xf32> -> vector<96x256xf32>
    %c0_4 = arith.constant 0 : index
    %c0_5 = arith.constant 0 : index
    %4 = vector.load %arg6[%c0_4, %c0_5] : memref<96x1xf32, #tpu.memory_space<vmem>>, vector<96x1xf32>
    %5 = vector.broadcast %4 : vector<96x1xf32> to vector<96x256xf32>
    %6 = arith.addf %3, %5 : vector<96x256xf32>
    %c0_6 = arith.constant 0 : index
    %c0_7 = arith.constant 0 : index
    %7 = vector.load %arg5[%c0_6, %c0_7] : memref<96x32xbf16, #tpu.memory_space<vmem>>, vector<96x32xbf16>
    %c0_8 = arith.constant 0 : index
    %c0_9 = arith.constant 0 : index
    %8 = vector.load %arg7[%c0_8, %c0_9] : memref<64x96xbf16, #tpu.memory_space<vmem>>, vector<64x96xbf16>
    %c0_10 = arith.constant 0 : index
    %c0_11 = arith.constant 0 : index
    %9 = vector.load %arg8[%c0_10, %c0_11] : memref<64x1xf32, #tpu.memory_space<vmem>>, vector<64x1xf32>
    %c0_12 = arith.constant 0 : index
    %c0_13 = arith.constant 0 : index
    %10 = vector.load %arg9[%c0_12, %c0_13] : memref<1x64xbf16, #tpu.memory_space<vmem>>, vector<1x64xbf16>
    %c0_i32 = arith.constant 0 : i32
    %c25_i32 = arith.constant 25 : i32
    %11 = arith.addi %c0_i32, %c25_i32 : i32
    %c1_i32 = arith.constant 1 : i32
    scf.for %arg14 = %c0_i32 to %11 step %c1_i32  : i32 {
      %c0_25 = arith.constant 0 : index
      %21 = arith.index_cast %arg14 : i32 to index
      %c0_26 = arith.constant 0 : index
      %c0_27 = arith.constant 0 : index
      %22 = vector.load %arg3[%c0_25, %21, %c0_26, %c0_27] : memref<1x25x32x256xbf16, #tpu.memory_space<vmem>>, vector<1x1x32x256xbf16>
      %23 = vector.shape_cast %22 : vector<1x1x32x256xbf16> to vector<32x256xbf16>
      %cst_28 = arith.constant dense<0.000000e+00> : vector<96x256xf32>
      %24 = tpu.matmul %7, %23, %cst_28 {dimension_numbers = #tpu.dot_dimension_numbers<[1], [0], [0], [1], [0, 0, 1, 1], [], []>} : vector<96x32xbf16>, vector<32x256xbf16>, vector<96x256xf32> -> vector<96x256xf32>
      %25 = arith.addf %24, %6 : vector<96x256xf32>
      %cst_29 = arith.constant 0.000000e+00 : f32
      %26 = vector.broadcast %cst_29 : f32 to vector<96x256xf32>
      %27 = arith.maximumf %25, %26 : vector<96x256xf32>
      %28 = arith.truncf %27 : vector<96x256xf32> to vector<96x256xbf16>
      %cst_30 = arith.constant dense<0.000000e+00> : vector<64x256xf32>
      %29 = tpu.matmul %8, %28, %cst_30 {dimension_numbers = #tpu.dot_dimension_numbers<[1], [0], [0], [1], [0, 0, 1, 1], [], []>} : vector<64x96xbf16>, vector<96x256xbf16>, vector<64x256xf32> -> vector<64x256xf32>
      %30 = vector.broadcast %9 : vector<64x1xf32> to vector<64x256xf32>
      %31 = arith.addf %29, %30 : vector<64x256xf32>
      %cst_31 = arith.constant 0.000000e+00 : f32
      %32 = vector.broadcast %cst_31 : f32 to vector<64x256xf32>
      %33 = arith.maximumf %31, %32 : vector<64x256xf32>
      %34 = arith.truncf %33 : vector<64x256xf32> to vector<64x256xbf16>
      %cst_32 = arith.constant dense<0.000000e+00> : vector<1x256xf32>
      %35 = tpu.matmul %10, %34, %cst_32 {dimension_numbers = #tpu.dot_dimension_numbers<[1], [0], [0], [1], [0, 0, 1, 1], [], []>} : vector<1x64xbf16>, vector<64x256xbf16>, vector<1x256xf32> -> vector<1x256xf32>
      %36 = arith.index_cast %arg14 : i32 to index
      %c0_33 = arith.constant 0 : index
      %37 = vector.load %arg13[%36, %c0_33] : memref<25x256xf32, #tpu.memory_space<vmem>>, vector<1x256xf32>
      tpu.vector_store %arg13[%36, %c0_33], %35 {strides = array<i32>} : memref<25x256xf32, #tpu.memory_space<vmem>>, vector<1x256xf32>,
    }
    %c25_i32_14 = arith.constant 25 : i32
    %c0_15 = arith.constant 0 : index
    %c0_16 = arith.constant 0 : index
    %12 = vector.load %arg10[%c0_15, %c0_16] : memref<25x25xf32, #tpu.memory_space<vmem>>, vector<25x25xf32>
    %c0_17 = arith.constant 0 : index
    %c0_18 = arith.constant 0 : index
    %13 = vector.load %arg13[%c0_17, %c0_18] : memref<25x256xf32, #tpu.memory_space<vmem>>, vector<25x256xf32>
    %cst_19 = arith.constant dense<0.000000e+00> : vector<25x256xf32>
    %14 = tpu.matmul %12, %13, %cst_19 {dimension_numbers = #tpu.dot_dimension_numbers<[1], [0], [0], [1], [0, 0, 1, 1], [], []>} : vector<25x25xf32>, vector<25x256xf32>, vector<25x256xf32> -> vector<25x256xf32>
    %c0_20 = arith.constant 0 : index
    %c0_21 = arith.constant 0 : index
    %15 = vector.load %arg11[%c0_20, %c0_21] : memref<25x1xf32, #tpu.memory_space<vmem>>, vector<25x1xf32>
    %16 = vector.broadcast %15 : vector<25x1xf32> to vector<25x256xf32>
    %17 = arith.addf %14, %16 : vector<25x256xf32>
    %c0_22 = arith.constant 0 : index
    %c0_23 = arith.constant 0 : index
    %c0_24 = arith.constant 0 : index
    %18 = vector.load %arg12[%c0_22, %c0_23, %c0_24] : memref<1x25x256xf32, #tpu.memory_space<vmem>>, vector<1x25x256xf32>
    %19 = vector.shape_cast %18 : vector<1x25x256xf32> to vector<25x256xf32>
    %20 = vector.shape_cast %17 : vector<25x256xf32> to vector<1x25x256xf32>
    tpu.vector_store %arg12[%c0_22, %c0_23, %c0_24], %20 {strides = array<i32>} : memref<1x25x256xf32, #tpu.memory_space<vmem>>, vector<1x25x256xf32>,
    return
  }
  func.func @transform_0(%arg0: i32, %arg1: i32) -> (i32, i32, i32) {
    %c0_i32 = arith.constant 0 : i32
    %c0_i32_0 = arith.constant 0 : i32
    return %arg0, %c0_i32, %arg1 : i32, i32, i32
  }
  func.func @transform_1(%arg0: i32, %arg1: i32) -> (i32, i32, i32, i32) {
    %c0_i32 = arith.constant 0 : i32
    %c0_i32_0 = arith.constant 0 : i32
    %c0_i32_1 = arith.constant 0 : i32
    return %arg0, %c0_i32, %c0_i32_0, %arg1 : i32, i32, i32, i32
  }
  func.func @transform_2(%arg0: i32, %arg1: i32) -> (i32, i32) {
    %c0_i32 = arith.constant 0 : i32
    %c0_i32_0 = arith.constant 0 : i32
    %c0_i32_1 = arith.constant 0 : i32
    return %c0_i32, %c0_i32_0 : i32, i32
  }
  func.func @transform_3(%arg0: i32, %arg1: i32) -> (i32, i32) {
    %c0_i32 = arith.constant 0 : i32
    %c0_i32_0 = arith.constant 0 : i32
    %c0_i32_1 = arith.constant 0 : i32
    return %c0_i32, %c0_i32_0 : i32, i32
  }
  func.func @transform_4(%arg0: i32, %arg1: i32) -> (i32, i32) {
    %c0_i32 = arith.constant 0 : i32
    %c0_i32_0 = arith.constant 0 : i32
    %c0_i32_1 = arith.constant 0 : i32
    return %c0_i32, %c0_i32_0 : i32, i32
  }
  func.func @transform_5(%arg0: i32, %arg1: i32) -> (i32, i32) {
    %c0_i32 = arith.constant 0 : i32
    %c0_i32_0 = arith.constant 0 : i32
    %c0_i32_1 = arith.constant 0 : i32
    return %c0_i32, %c0_i32_0 : i32, i32
  }
  func.func @transform_6(%arg0: i32, %arg1: i32) -> (i32, i32) {
    %c0_i32 = arith.constant 0 : i32
    %c0_i32_0 = arith.constant 0 : i32
    %c0_i32_1 = arith.constant 0 : i32
    return %c0_i32, %c0_i32_0 : i32, i32
  }
  func.func @transform_7(%arg0: i32, %arg1: i32) -> (i32, i32) {
    %c0_i32 = arith.constant 0 : i32
    %c0_i32_0 = arith.constant 0 : i32
    %c0_i32_1 = arith.constant 0 : i32
    return %c0_i32, %c0_i32_0 : i32, i32
  }
  func.func @transform_8(%arg0: i32, %arg1: i32) -> (i32, i32) {
    %c0_i32 = arith.constant 0 : i32
    %c0_i32_0 = arith.constant 0 : i32
    %c0_i32_1 = arith.constant 0 : i32
    return %c0_i32, %c0_i32_0 : i32, i32
  }
  func.func @transform_9(%arg0: i32, %arg1: i32) -> (i32, i32) {
    %c0_i32 = arith.constant 0 : i32
    %c0_i32_0 = arith.constant 0 : i32
    %c0_i32_1 = arith.constant 0 : i32
    return %c0_i32, %c0_i32_0 : i32, i32
  }
  func.func @transform_10(%arg0: i32, %arg1: i32) -> (i32, i32, i32) {
    %c0_i32 = arith.constant 0 : i32
    %c0_i32_0 = arith.constant 0 : i32
    return %arg0, %c0_i32, %arg1 : i32, i32, i32
  }
}

</mosaic_0001>

<llo_original>
// kernel: tile.9
$region0: #{tile.9}
  #allocation0 [shape = 's32[1]{0}', space=sflag, size = 0x4, scoped, tag = 'scoped memory for tile.9']
  %s0 = inlined_call_operand.vmem [shape: f32[5], index: 0, kind: input, shape index: {}]
  %s1 = inlined_call_operand.vmem [shape: f32[5,5], index: 1, kind: output, shape index: {}]
  // Predicated region
  $region2: #{tile.9} parent=0 // pred_check
    _
  $region3: #{tile.9} parent=0 // pred_check_branch
    %3 = sbr.rel (0) target = $region5
  $region4: #{tile.9} parent=0 // pred_region
    _
  $region5: #{tile.9} parent=0 // pred_fallthru
    _
  %v4 = vld [vmem:[%s0] ss:$0 sm:$0xff]
  %5 = vst [vmem:[%s1] sm:$0xff] %v4

// kernel: correlation_forward.2
$region0: #{correlation_forward.2}
  #allocation0 [shape = 'u32[]', space=smem, size = 0x4, offset = 0x4, fixed_abs, tag = 'smem constant byte address 0x4 - core index']
  #allocation1 [shape = 'u32[144,128]{1,0:T(1,128)}', space=vmem, size = 0x12000, scoped, tag = 'internal scratch']
  #allocation2 [shape = 'f32[25,256]{1,0:T(8,128)}', space=vmem, size = 0x8000, scoped, tag = 'scratch operand']
  %s0 = inlined_call_operand.vmem [shape: bf16[2,32,256], index: 0, kind: input, shape index: {}]
  %s1 = inlined_call_operand.vmem [shape: bf16[2,25,32,256], index: 1, kind: input, shape index: {}]
  %s2 = inlined_call_operand.vmem [shape: bf16[96,32], index: 2, kind: input, shape index: {}]
  %s3 = inlined_call_operand.vmem [shape: bf16[96,32], index: 3, kind: input, shape index: {}]
  %s4 = inlined_call_operand.vmem [shape: f32[96,1], index: 4, kind: input, shape index: {}]
  %s5 = inlined_call_operand.vmem [shape: bf16[64,96], index: 5, kind: input, shape index: {}]
  %s6 = inlined_call_operand.vmem [shape: f32[64,1], index: 6, kind: input, shape index: {}]
  %s7 = inlined_call_operand.vmem [shape: bf16[1,64], index: 7, kind: input, shape index: {}]
  %s8 = inlined_call_operand.vmem [shape: f32[25,25], index: 8, kind: input, shape index: {}]
  %s9 = inlined_call_operand.vmem [shape: f32[25,1], index: 9, kind: input, shape index: {}]
  %s10 = inlined_call_operand.vmem [shape: f32[2,25,256], index: 10, kind: output, shape index: {}]
  %s11 = sld [smem:[#allocation0]]
  $region80: #{correlation_forward.2} parent=0
    _
  %s13 = ssub.s32 1, %s11
  %s14 = scalar_select 0, %s13, %s11
  loop: start=0, step=1, limit=4
  $region2: #{correlation_forward.2} parent=0 // loop_pre_header
    _
  $region3: #{correlation_forward.2} parent=0 // loop_header
    %s16 = sphi 0, %s20
    %p17 = scmp.ge.s32.totalorder %s16, 4
    %s23 = sphi 0, %s35
    %s24 = sphi 0, %s31
    %s25 = sphi 0, %s23
    %s26 = sphi 0, %s24
    %s27 = sphi 0, %s25
    %s28 = sphi 0, %s26
    %s40 = sphi 0, %s42
    %s43 = sphi 0, %s40
    %s44 = sphi 0, %s43
    %s60 = sphi 0, %s44
    %s68 = sphi 0, %s70
    %s71 = sphi 0, %s68
    %s72 = sphi 0, %s71
    %s88 = sphi 0, %s72
    %s92 = sphi 0, %s92
    %s94 = sphi 0, %s92
    %s95 = sphi 0, %s94
    %s109 = sphi 0, %s95
    %s113 = sphi 0, %s113
    %s115 = sphi 0, %s113
    %s116 = sphi 0, %s115
    %s130 = sphi 0, %s116
    %s134 = sphi 0, %s134
    %s136 = sphi 0, %s134
    %s137 = sphi 0, %s136
    %s151 = sphi 0, %s137
    %s155 = sphi 0, %s155
    %s157 = sphi 0, %s155
    %s158 = sphi 0, %s157
    %s172 = sphi 0, %s158
    %s176 = sphi 0, %s176
    %s178 = sphi 0, %s176
    %s179 = sphi 0, %s178
    %s193 = sphi 0, %s179
    %s197 = sphi 0, %s197
    %s199 = sphi 0, %s197
    %s200 = sphi 0, %s199
    %s214 = sphi 0, %s200
    %s218 = sphi 0, %s218
    %s220 = sphi 0, %s218
    %s221 = sphi 0, %s220
    %s235 = sphi 0, %s221
    %s239 = sphi 0, %s239
    %s241 = sphi 0, %s239
    %s242 = sphi 0, %s241
    %s256 = sphi 0, %s242
    %s264 = sphi 0, %s266
    %s267 = sphi 0, %s264
    %s268 = sphi 0, %s267
    %s284 = sphi 0, %s268
  $region4: #{correlation_forward.2} parent=0 // loop_header_branch
    %19 = sbr.rel (%p17) target = $region8
  $region5: #{correlation_forward.2} parent=0 // loop_body
    %s21 = ssub.s32 %s16, 1
    %s22 = ssub.s32 %s16, 2
    %s29 = sadd.s32 1, %s24
    %p30 = scmp.ge.s32.totalorder %s29, 1
    %s31 = scalar_select %p30, 0, %s29
    %s32 = sadd.s32 1, %s23
    %s33 = scalar_select %p30, %s32, %s23
    %p34 = scmp.ge.s32.totalorder %s33, 2
    %s35 = scalar_select %p34, 0, %s33
    %s36 = ssub.s32 %s23, %s35
    %s37 = ssub.s32 %s24, %s31
    %s38 = sor.u32 %s36, %s37
    %p39 = scmp.eq.s32.totalorder %s38, 0
    %s41 = sadd.s32 %s40, 1
    %s42 = scalar_select %p39, %s40, %s41
    %p45 = pneg %p39
    %p46 = scmp.eq.s32.totalorder %s16, 1
    %p47 = por %p45, %p46
    %p48 = scmp.ne.s32.totalorder %s40, %s43
    %p49 = scmp.eq.s32.totalorder %s16, 0
    %p50 = por %p48, %p49
    %p51 = scmp.ne.s32.totalorder %s40, %s43
    %p52 = scmp.eq.s32.totalorder %s21, 1
    %p53 = por %p51, %p52
    %p54 = scmp.ne.s32.totalorder %s43, %s44
    %p55 = scmp.eq.s32.totalorder %s21, 0
    %p56 = por %p54, %p55
    %p57 = scmp.ne.s32.totalorder %s43, %s44
    %p58 = scmp.eq.s32.totalorder %s22, 1
    %p59 = por %p57, %p58
    %p61 = scmp.ne.s32.totalorder %s44, %s60
    %p62 = scmp.eq.s32.totalorder %s22, 0
    %p63 = por %p61, %p62
    %s64 = ssub.s32 %s23, %s35
    %s65 = ssub.s32 %s24, %s31
    %s66 = sor.u32 %s64, %s65
    %p67 = scmp.eq.s32.totalorder %s66, 0
    %s69 = sadd.s32 %s68, 1
    %s70 = scalar_select %p67, %s68, %s69
    %p73 = pneg %p67
    %p74 = scmp.eq.s32.totalorder %s16, 1
    %p75 = por %p73, %p74
    %p76 = scmp.ne.s32.totalorder %s68, %s71
    %p77 = scmp.eq.s32.totalorder %s16, 0
    %p78 = por %p76, %p77
    %p79 = scmp.ne.s32.totalorder %s68, %s71
    %p80 = scmp.eq.s32.totalorder %s21, 1
    %p81 = por %p79, %p80
    %p82 = scmp.ne.s32.totalorder %s71, %s72
    %p83 = scmp.eq.s32.totalorder %s21, 0
    %p84 = por %p82, %p83
    %p85 = scmp.ne.s32.totalorder %s71, %s72
    %p86 = scmp.eq.s32.totalorder %s22, 1
    %p87 = por %p85, %p86
    %p89 = scmp.ne.s32.totalorder %s72, %s88
    %p90 = scmp.eq.s32.totalorder %s22, 0
    %p91 = por %p89, %p90
    %s93 = sadd.s32 %s92, 1
    %p96 = scmp.eq.s32.totalorder %s16, 1
    %p97 = scmp.ne.s32.totalorder %s92, %s94
    %p98 = scmp.eq.s32.totalorder %s16, 0
    %p99 = por %p97, %p98
    %p100 = scmp.ne.s32.totalorder %s92, %s94
    %p101 = scmp.eq.s32.totalorder %s21, 1
    %p102 = por %p100, %p101
    %p103 = scmp.ne.s32.totalorder %s94, %s95
    %p104 = scmp.eq.s32.totalorder %s21, 0
    %p105 = por %p103, %p104
    %p106 = scmp.ne.s32.totalorder %s94, %s95
    %p107 = scmp.eq.s32.totalorder %s22, 1
    %p108 = por %p106, %p107
    %p110 = scmp.ne.s32.totalorder %s95, %s109
    %p111 = scmp.eq.s32.totalorder %s22, 0
    %p112 = por %p110, %p111
    %s114 = sadd.s32 %s113, 1
    %p117 = scmp.eq.s32.totalorder %s16, 1
    %p118 = scmp.ne.s32.totalorder %s113, %s115
    %p119 = scmp.eq.s32.totalorder %s16, 0
    %p120 = por %p118, %p119
    %p121 = scmp.ne.s32.totalorder %s113, %s115
    %p122 = scmp.eq.s32.totalorder %s21, 1
    %p123 = por %p121, %p122
    %p124 = scmp.ne.s32.totalorder %s115, %s116
    %p125 = scmp.eq.s32.totalorder %s21, 0
    %p126 = por %p124, %p125
    %p127 = scmp.ne.s32.totalorder %s115, %s116
    %p128 = scmp.eq.s32.totalorder %s22, 1
    %p129 = por %p127, %p128
    %p131 = scmp.ne.s32.totalorder %s116, %s130
    %p132 = scmp.eq.s32.totalorder %s22, 0
    %p133 = por %p131, %p132
    %s135 = sadd.s32 %s134, 1
    %p138 = scmp.eq.s32.totalorder %s16, 1
    %p139 = scmp.ne.s32.totalorder %s134, %s136
    %p140 = scmp.eq.s32.totalorder %s16, 0
    %p141 = por %p139, %p140
    %p142 = scmp.ne.s32.totalorder %s134, %s136
    %p143 = scmp.eq.s32.totalorder %s21, 1
    %p144 = por %p142, %p143
    %p145 = scmp.ne.s32.totalorder %s136, %s137
    %p146 = scmp.eq.s32.totalorder %s21, 0
    %p147 = por %p145, %p146
    %p148 = scmp.ne.s32.totalorder %s136, %s137
    %p149 = scmp.eq.s32.totalorder %s22, 1
    %p150 = por %p148, %p149
    %p152 = scmp.ne.s32.totalorder %s137, %s151
    %p153 = scmp.eq.s32.totalorder %s22, 0
    %p154 = por %p152, %p153
    %s156 = sadd.s32 %s155, 1
    %p159 = scmp.eq.s32.totalorder %s16, 1
    %p160 = scmp.ne.s32.totalorder %s155, %s157
    %p161 = scmp.eq.s32.totalorder %s16, 0
    %p162 = por %p160, %p161
    %p163 = scmp.ne.s32.totalorder %s155, %s157
    %p164 = scmp.eq.s32.totalorder %s21, 1
    %p165 = por %p163, %p164
    %p166 = scmp.ne.s32.totalorder %s157, %s158
    %p167 = scmp.eq.s32.totalorder %s21, 0
    %p168 = por %p166, %p167
    %p169 = scmp.ne.s32.totalorder %s157, %s158
    %p170 = scmp.eq.s32.totalorder %s22, 1
    %p171 = por %p169, %p170
    %p173 = scmp.ne.s32.totalorder %s158, %s172
    %p174 = scmp.eq.s32.totalorder %s22, 0
    %p175 = por %p173, %p174
    %s177 = sadd.s32 %s176, 1
    %p180 = scmp.eq.s32.totalorder %s16, 1
    %p181 = scmp.ne.s32.totalorder %s176, %s178
    %p182 = scmp.eq.s32.totalorder %s16, 0
    %p183 = por %p181, %p182
    %p184 = scmp.ne.s32.totalorder %s176, %s178
    %p185 = scmp.eq.s32.totalorder %s21, 1
    %p186 = por %p184, %p185
    %p187 = scmp.ne.s32.totalorder %s178, %s179
    %p188 = scmp.eq.s32.totalorder %s21, 0
    %p189 = por %p187, %p188
    %p190 = scmp.ne.s32.totalorder %s178, %s179
    %p191 = scmp.eq.s32.totalorder %s22, 1
    %p192 = por %p190, %p191
    %p194 = scmp.ne.s32.totalorder %s179, %s193
    %p195 = scmp.eq.s32.totalorder %s22, 0
    %p196 = por %p194, %p195
    %s198 = sadd.s32 %s197, 1
    %p201 = scmp.eq.s32.totalorder %s16, 1
    %p202 = scmp.ne.s32.totalorder %s197, %s199
    %p203 = scmp.eq.s32.totalorder %s16, 0
    %p204 = por %p202, %p203
    %p205 = scmp.ne.s32.totalorder %s197, %s199
    %p206 = scmp.eq.s32.totalorder %s21, 1
    %p207 = por %p205, %p206
    %p208 = scmp.ne.s32.totalorder %s199, %s200
    %p209 = scmp.eq.s32.totalorder %s21, 0
    %p210 = por %p208, %p209
    %p211 = scmp.ne.s32.totalorder %s199, %s200
    %p212 = scmp.eq.s32.totalorder %s22, 1
    %p213 = por %p211, %p212
    %p215 = scmp.ne.s32.totalorder %s200, %s214
    %p216 = scmp.eq.s32.totalorder %s22, 0
    %p217 = por %p215, %p216
    %s219 = sadd.s32 %s218, 1
    %p222 = scmp.eq.s32.totalorder %s16, 1
    %p223 = scmp.ne.s32.totalorder %s218, %s220
    %p224 = scmp.eq.s32.totalorder %s16, 0
    %p225 = por %p223, %p224
    %p226 = scmp.ne.s32.totalorder %s218, %s220
    %p227 = scmp.eq.s32.totalorder %s21, 1
    %p228 = por %p226, %p227
    %p229 = scmp.ne.s32.totalorder %s220, %s221
    %p230 = scmp.eq.s32.totalorder %s21, 0
    %p231 = por %p229, %p230
    %p232 = scmp.ne.s32.totalorder %s220, %s221
    %p233 = scmp.eq.s32.totalorder %s22, 1
    %p234 = por %p232, %p233
    %p236 = scmp.ne.s32.totalorder %s221, %s235
    %p237 = scmp.eq.s32.totalorder %s22, 0
    %p238 = por %p236, %p237
    %s240 = sadd.s32 %s239, 1
    %p243 = scmp.eq.s32.totalorder %s16, 1
    %p244 = scmp.ne.s32.totalorder %s239, %s241
    %p245 = scmp.eq.s32.totalorder %s16, 0
    %p246 = por %p244, %p245
    %p247 = scmp.ne.s32.totalorder %s239, %s241
    %p248 = scmp.eq.s32.totalorder %s21, 1
    %p249 = por %p247, %p248
    %p250 = scmp.ne.s32.totalorder %s241, %s242
    %p251 = scmp.eq.s32.totalorder %s21, 0
    %p252 = por %p250, %p251
    %p253 = scmp.ne.s32.totalorder %s241, %s242
    %p254 = scmp.eq.s32.totalorder %s22, 1
    %p255 = por %p253, %p254
    %p257 = scmp.ne.s32.totalorder %s242, %s256
    %p258 = scmp.eq.s32.totalorder %s22, 0
    %p259 = por %p257, %p258
    %s260 = ssub.s32 %s23, %s35
    %s261 = ssub.s32 %s24, %s31
    %s262 = sor.u32 %s260, %s261
    %p263 = scmp.eq.s32.totalorder %s262, 0
    %s265 = sadd.s32 %s264, 1
    %s266 = scalar_select %p263, %s264, %s265
    %p269 = pneg %p263
    %p270 = scmp.eq.s32.totalorder %s16, 1
    %p271 = por %p269, %p270
    %p272 = scmp.ne.s32.totalorder %s264, %s267
    %p273 = scmp.eq.s32.totalorder %s16, 0
    %p274 = por %p272, %p273
    %p275 = scmp.ne.s32.totalorder %s264, %s267
    %p276 = scmp.eq.s32.totalorder %s21, 1
    %p277 = por %p275, %p276
    %p278 = scmp.ne.s32.totalorder %s267, %s268
    %p279 = scmp.eq.s32.totalorder %s21, 0
    %p280 = por %p278, %p279
    %p281 = scmp.ne.s32.totalorder %s267, %s268
    %p282 = scmp.eq.s32.totalorder %s22, 1
    %p283 = por %p281, %p282
    %p285 = scmp.ne.s32.totalorder %s268, %s284
    %p286 = scmp.eq.s32.totalorder %s22, 0
    %p287 = por %p285, %p286
    %p288 = scmp.le.s32.totalorder 1, %s16
    %p289 = scmp.lt.s32.totalorder %s16, 3
    %p290 = pnand %p288, %p289
    %p291 = pneg %p290
    // Predicated region
    $region9: #{correlation_forward.2} parent=5 // pred_check
      _
    $region10: #{correlation_forward.2} parent=5 // pred_check_branch
      %293 = sbr.rel (%p290) target = $region12
    $region11: #{correlation_forward.2} parent=5 // pred_region
      %s294 = ssub.s32 %s16, 1
      // Predicated region
      $region13: #{correlation_forward.2} parent=11 // pred_check
        %p295 = pneg %p105
      $region14: #{correlation_forward.2} parent=11 // pred_check_branch
        %297 = sbr.rel (%p295) target = $region16
      $region15: #{correlation_forward.2} parent=11 // pred_region
        _
      $region16: #{correlation_forward.2} parent=11 // pred_fallthru
        _
      // Predicated region
      $region17: #{correlation_forward.2} parent=11 // pred_check
        %p298 = pneg %p126
      $region18: #{correlation_forward.2} parent=11 // pred_check_branch
        %300 = sbr.rel (%p298) target = $region20
      $region19: #{correlation_forward.2} parent=11 // pred_region
        _
      $region20: #{correlation_forward.2} parent=11 // pred_fallthru
        _
      // Predicated region
      $region21: #{correlation_forward.2} parent=11 // pred_check
        %p301 = pneg %p147
      $region22: #{correlation_forward.2} parent=11 // pred_check_branch
        %303 = sbr.rel (%p301) target = $region24
      $region23: #{correlation_forward.2} parent=11 // pred_region
        _
      $region24: #{correlation_forward.2} parent=11 // pred_fallthru
        _
      // Predicated region
      $region25: #{correlation_forward.2} parent=11 // pred_check
        %p304 = pneg %p168
      $region26: #{correlation_forward.2} parent=11 // pred_check_branch
        %306 = sbr.rel (%p304) target = $region28
      $region27: #{correlation_forward.2} parent=11 // pred_region
        _
      $region28: #{correlation_forward.2} parent=11 // pred_fallthru
        _
      // Predicated region
      $region29: #{correlation_forward.2} parent=11 // pred_check
        %p307 = pneg %p189
      $region30: #{correlation_forward.2} parent=11 // pred_check_branch
        %309 = sbr.rel (%p307) target = $region32
      $region31: #{correlation_forward.2} parent=11 // pred_region
        _
      $region32: #{correlation_forward.2} parent=11 // pred_fallthru
        _
      // Predicated region
      $region33: #{correlation_forward.2} parent=11 // pred_check
        %p310 = pneg %p210
      $region34: #{correlation_forward.2} parent=11 // pred_check_branch
        %312 = sbr.rel (%p310) target = $region36
      $region35: #{correlation_forward.2} parent=11 // pred_region
        _
      $region36: #{correlation_forward.2} parent=11 // pred_fallthru
        _
      // Predicated region
      $region37: #{correlation_forward.2} parent=11 // pred_check
        %p313 = pneg %p231
      $region38: #{correlation_forward.2} parent=11 // pred_check_branch
        %315 = sbr.rel (%p313) target = $region40
      $region39: #{correlation_forward.2} parent=11 // pred_region
        _
      $region40: #{correlation_forward.2} parent=11 // pred_fallthru
        _
      // Predicated region
      $region41: #{correlation_forward.2} parent=11 // pred_check
        %p316 = pneg %p252
      $region42: #{correlation_forward.2} parent=11 // pred_check_branch
        %318 = sbr.rel (%p316) target = $region44
      $region43: #{correlation_forward.2} parent=11 // pred_region
        _
      $region44: #{correlation_forward.2} parent=11 // pred_fallthru
        _
    $region12: #{correlation_forward.2} parent=5 // pred_fallthru
      _
    %p319 = scmp.lt.s32.totalorder %s16, 2
    // Predicated region
    $region45: #{correlation_forward.2} parent=5 // pred_check
      %p320 = pneg %p319
    $region46: #{correlation_forward.2} parent=5 // pred_check_branch
      %322 = sbr.rel (%p320) target = $region48
    $region47: #{correlation_forward.2} parent=5 // pred_region
      // Predicated region
      $region49: #{correlation_forward.2} parent=47 // pred_check
        %p323 = pneg %p50
      $region50: #{correlation_forward.2} parent=47 // pred_check_branch
        %325 = sbr.rel (%p323) target = $region52
      $region51: #{correlation_forward.2} parent=47 // pred_region
        %s326 = smul.u32 2, %s24
        %p327 = scmp.lt.s32.totalorder %s23, 1
        %s328 = scalar_select %p327, %s23, 1
        %p329 = scmp.lt.s32.totalorder %s326, 1
        %s330 = scalar_select %p329, %s326, 1
        %s331 = smul.addr %s328, 8
        %s332 = sadd.s32 %s330, %s331
        %s333 = smul.addr %s332, 4
        %s334 = scalar_lea.vmem %s0, %s333
        %s335 = smul.u32 2, %s24
      $region52: #{correlation_forward.2} parent=47 // pred_fallthru
        _
      // Predicated region
      $region53: #{correlation_forward.2} parent=47 // pred_check
        %p336 = pneg %p78
      $region54: #{correlation_forward.2} parent=47 // pred_check_branch
        %338 = sbr.rel (%p336) target = $region56
      $region55: #{correlation_forward.2} parent=47 // pred_region
        %s339 = smul.u32 2, %s24
        %p340 = scmp.lt.s32.totalorder %s23, 1
        %s341 = scalar_select %p340, %s23, 1
        %p342 = scmp.lt.s32.totalorder %s339, 1
        %s343 = scalar_select %p342, %s339, 1
        %s344 = smul.addr %s341, 200
        %s345 = sadd.s32 %s343, %s344
        %s346 = smul.addr %s345, 4
        %s347 = scalar_lea.vmem %s1, %s346
        %s348 = smul.u32 2, %s24
      $region56: #{correlation_forward.2} parent=47 // pred_fallthru
        _
    $region48: #{correlation_forward.2} parent=5 // pred_fallthru
      _
    %p349 = scmp.le.s32.totalorder 1, %s16
    %p350 = scmp.lt.s32.totalorder %s16, 3
    %p351 = pnand %p349, %p350
    %p352 = pneg %p351
    // Predicated region
    $region57: #{correlation_forward.2} parent=5 // pred_check
      _
    $region58: #{correlation_forward.2} parent=5 // pred_check_branch
      %354 = sbr.rel (%p351) target = $region60
    $region59: #{correlation_forward.2} parent=5 // pred_region
      %s355 = ssub.s32 %s16, 1
      %s356 = smul.u32 2, %s26
      %p357 = scmp.lt.s32.totalorder %s25, 1
      %s358 = scalar_select %p357, %s25, 1
      %p359 = scmp.lt.s32.totalorder %s356, 1
      %s360 = scalar_select %p359, %s356, 1
      %s361 = smul.addr %s358, 8
      %s362 = sadd.s32 %s360, %s361
      %s363 = smul.addr %s362, 4
      %s364 = scalar_lea.vmem %s0, %s363
      %p365 = pneg %p56
      %p366 = pneg %p53
      %s367 = smul.u32 2, %s26
      %p368 = scmp.lt.s32.totalorder %s25, 1
      %s369 = scalar_select %p368, %s25, 1
      %p370 = scmp.lt.s32.totalorder %s367, 1
      %s371 = scalar_select %p370, %s367, 1
      %s372 = smul.addr %s369, 200
      %s373 = sadd.s32 %s371, %s372
      %s374 = smul.addr %s373, 4
      %s375 = scalar_lea.vmem %s1, %s374
      %p376 = pneg %p84
      %p377 = pneg %p81
      %p378 = pneg %p105
      %p379 = pneg %p102
      %p380 = pneg %p126
      %p381 = pneg %p123
      %p382 = pneg %p147
      %p383 = pneg %p144
      %p384 = pneg %p168
      %p385 = pneg %p165
      %p386 = pneg %p189
      %p387 = pneg %p186
      %p388 = pneg %p210
      %p389 = pneg %p207
      %p390 = pneg %p231
      %p391 = pneg %p228
      %p392 = pneg %p252
      %p393 = pneg %p249
      %p394 = pneg %p280
      %p395 = pneg %p277
      %s396 = smul.u32 2, %s26
      %p397 = scmp.lt.s32.totalorder %s25, 1
      %s398 = scalar_select %p397, %s25, 1
      %p399 = scmp.lt.s32.totalorder %s396, 1
      %s400 = scalar_select %p399, %s396, 1
      %s401 = smul.addr %s398, 8
      %s402 = sadd.s32 %s400, %s401
      %s403 = smul.addr %s402, 8
      %s404 = scalar_lea.vmem %s10, %s403
      %s405 = smul.u32 2, %s26
      %p406 = scmp.lt.s32.totalorder %s25, 1
      %s407 = scalar_select %p406, %s25, 1
      %p408 = scmp.lt.s32.totalorder %s405, 1
      %s409 = scalar_select %p408, %s405, 1
      %s410 = smul.addr %s407, 8
      %s411 = sadd.s32 %s409, %s410
      %s412 = smul.addr %s411, 4
      %s413 = scalar_lea.vmem %s0, %s412
      %s414 = smul.u32 2, %s26
      %s415 = smul.u32 2, %s26
      %p416 = scmp.lt.s32.totalorder %s25, 1
      %s417 = scalar_select %p416, %s25, 1
      %p418 = scmp.lt.s32.totalorder %s415, 1
      %s419 = scalar_select %p418, %s415, 1
      %s420 = smul.addr %s417, 200
      %s421 = sadd.s32 %s419, %s420
      %s422 = smul.addr %s421, 4
      %s423 = scalar_lea.vmem %s1, %s422
      %s424 = smul.u32 2, %s26
      %s425 = smul.u32 2, %s26
      %p426 = scmp.lt.s32.totalorder %s25, 1
      %s427 = scalar_select %p426, %s25, 1
      %p428 = scmp.lt.s32.totalorder %s425, 1
      %s429 = scalar_select %p428, %s425, 1
      %s430 = smul.addr %s427, 8
      %s431 = sadd.s32 %s429, %s430
      %s432 = smul.addr %s431, 8
      %s433 = scalar_lea.vmem %s10, %s432
      %s434 = smul.u32 2, %s26
      %v436 = vld [vmem:[%s413] sm:$0xff]
      %v437 = vld [vmem:[%s413 + $0x8] sm:$0xff]
      %v438 = vld [vmem:[%s413 + $0x10] sm:$0xff]
      %v439 = vld [vmem:[%s413 + $0x18] sm:$0xff]
      %v440 = vld [vmem:[%s2] sm:$0xf]
      %v441 = vld [vmem:[%s2 + $0x4] sm:$0xf]
      %v442 = vld [vmem:[%s2 + $0x8] sm:$0xf]
      %v443 = vld [vmem:[%s2 + $0xc] sm:$0xf]
      %v444 = vld [vmem:[%s2 + $0x10] sm:$0xf]
      %v445 = vld [vmem:[%s2 + $0x14] sm:$0xf]
      %v446 = vld [vmem:[%s2 + $0x18] sm:$0xf]
      %v447 = vld [vmem:[%s2 + $0x1c] sm:$0xf]
      %v448 = vld [vmem:[%s2 + $0x20] sm:$0xf]
      %v449 = vld [vmem:[%s2 + $0x24] sm:$0xf]
      %v450 = vld [vmem:[%s2 + $0x28] sm:$0xf]
      %v451 = vld [vmem:[%s2 + $0x2c] sm:$0xf]
      %v452 = vld [vmem:[%s4] sm:$0xff]
      %v453 = vld [vmem:[%s4 + $0x8] sm:$0xff]
      %v454 = vld [vmem:[%s4 + $0x10] sm:$0xff]
      %v455 = vld [vmem:[%s4 + $0x18] sm:$0xff]
      %v456 = vld [vmem:[%s4 + $0x20] sm:$0xff]
      %v457 = vld [vmem:[%s4 + $0x28] sm:$0xff]
      %v458 = vld [vmem:[%s4 + $0x30] sm:$0xff]
      %v459 = vld [vmem:[%s4 + $0x38] sm:$0xff]
      %v460 = vld [vmem:[%s4 + $0x40] sm:$0xff]
      %v461 = vld [vmem:[%s4 + $0x48] sm:$0xff]
      %v462 = vld [vmem:[%s4 + $0x50] sm:$0xff]
      %v463 = vld [vmem:[%s4 + $0x58] sm:$0xff]
      %465 = vset.pattern.permute.xlu0 0
      %466 = vperm.xlu0 %465, %v452
      %v467 = vpop.permute.xlu0 %466
      %470 = vset.pattern.permute.xlu0 0
      %471 = vperm.xlu0 %470, %v453
      %v472 = vpop.permute.xlu0 %471
      %475 = vset.pattern.permute.xlu0 0
      %476 = vperm.xlu0 %475, %v454
      %v477 = vpop.permute.xlu0 %476
      %480 = vset.pattern.permute.xlu0 0
      %481 = vperm.xlu0 %480, %v455
      %v482 = vpop.permute.xlu0 %481
      %485 = vset.pattern.permute.xlu0 0
      %486 = vperm.xlu0 %485, %v456
      %v487 = vpop.permute.xlu0 %486
      %490 = vset.pattern.permute.xlu0 0
      %491 = vperm.xlu0 %490, %v457
      %v492 = vpop.permute.xlu0 %491
      %495 = vset.pattern.permute.xlu0 0
      %496 = vperm.xlu0 %495, %v458
      %v497 = vpop.permute.xlu0 %496
      %500 = vset.pattern.permute.xlu0 0
      %501 = vperm.xlu0 %500, %v459
      %v502 = vpop.permute.xlu0 %501
      %505 = vset.pattern.permute.xlu0 0
      %506 = vperm.xlu0 %505, %v460
      %v507 = vpop.permute.xlu0 %506
      %510 = vset.pattern.permute.xlu0 0
      %511 = vperm.xlu0 %510, %v461
      %v512 = vpop.permute.xlu0 %511
      %515 = vset.pattern.permute.xlu0 0
      %516 = vperm.xlu0 %515, %v462
      %v517 = vpop.permute.xlu0 %516
      %520 = vset.pattern.permute.xlu0 0
      %521 = vperm.xlu0 %520, %v463
      %v522 = vpop.permute.xlu0 %521
      %v536 = vunpack.c.l.b16 %v440
      %v537 = vunpack.c.l.b16 %v441
      %v538 = vunpack.c.l.b16 %v442
      %v539 = vunpack.c.l.b16 %v443
      %v540 = vunpack.c.l.b16 %v444
      %v541 = vunpack.c.l.b16 %v445
      %v542 = vunpack.c.l.b16 %v446
      %v543 = vunpack.c.l.b16 %v447
      %v544 = vunpack.c.l.b16 %v448
      %v545 = vunpack.c.l.b16 %v449
      %v546 = vunpack.c.l.b16 %v450
      %v547 = vunpack.c.l.b16 %v451
      %v548 = vpack.c.b16 %v537, %v536
      %v549 = vpack.c.b16 %v539, %v538
      %v550 = vpack.c.b16 %v541, %v540
      %v551 = vpack.c.b16 %v543, %v542
      %v552 = vpack.c.b16 %v545, %v544
      %v553 = vpack.c.b16 %v547, %v546
      %v558 = vunpack.c.l.b16 %v436
      %v559 = vunpack.c.h.b16 %v436
      %v560 = vunpack.c.l.b16 %v437
      %v561 = vunpack.c.h.b16 %v437
      %v562 = vunpack.c.l.b16 %v438
      %v563 = vunpack.c.h.b16 %v438
      %v564 = vunpack.c.l.b16 %v439
      %v565 = vunpack.c.h.b16 %v439
      %v566 = vpack.c.b16 %v560, %v558
      %v567 = vpack.c.b16 %v561, %v559
      %v568 = vpack.c.b16 %v564, %v562
      %v569 = vpack.c.b16 %v565, %v563
      %vm574 = vcmask 261120
      %v576 = vsel %vm574, %v548, 0
      %v579 = vsel %vm574, %v549, 0
      %v582 = vsel %vm574, %v550, 0
      %v585 = vsel %vm574, %v551, 0
      %v588 = vsel %vm574, %v552, 0
      %v591 = vsel %vm574, %v553, 0
      %593 = vmatprep.subr.bf16.mxu0 %v567
      %594 = vmatpush1.bf16.msra.mxu0 %v566
      %595 = vmatprep.subr.bf16.mxu0 %v569
      %596 = vmatpush1.bf16.msra.mxu0 %v568
      %597 = vmatprep.subr.bf16.mxu0 0
      %598 = vmatpush1.bf16.msra.mxu0 0
      %599 = vmatprep.subr.bf16.mxu0 0
      %600 = vmatpush1.bf16.msra.mxu0 0
      %601 = vmatprep.subr.bf16.mxu0 0
      %602 = vmatpush1.bf16.msra.mxu0 0
      %603 = vmatprep.subr.bf16.mxu0 0
      %604 = vmatpush1.bf16.msra.mxu0 0
      %605 = vmatprep.subr.bf16.mxu0 0
      %606 = vmatpush1.bf16.msra.mxu0 0
      %607 = vmatprep.subr.bf16.mxu0 0
      %608 = vmatpush1.bf16.msra.mxu0 0
      %609 = vmatprep.subr.bf16.mxu0 0
      %610 = vmatpush1.bf16.msra.mxu0 0
      %611 = vmatprep.subr.bf16.mxu0 0
      %612 = vmatpush1.bf16.msra.mxu0 0
      %613 = vmatprep.subr.bf16.mxu0 0
      %614 = vmatpush1.bf16.msra.mxu0 0
      %615 = vmatprep.subr.bf16.mxu0 0
      %616 = vmatpush1.bf16.msra.mxu0 0
      %617 = vmatprep.subr.bf16.mxu0 0
      %618 = vmatpush1.bf16.msra.mxu0 0
      %619 = vmatprep.subr.bf16.mxu0 0
      %620 = vmatpush1.bf16.msra.mxu0 0
      %621 = vmatprep.subr.bf16.mxu0 0
      %622 = vmatpush1.bf16.msra.mxu0 0
      %623 = vmatprep.subr.bf16.mxu0 0
      %624 = vmatpush1.bf16.msra.mxu0 0
      %625 = vmatprep.mubr.bf16.mxu0 0
      %626 = vmatmul.mubr.bf16.gmra.mrb[0].mxu0 %v576
      %v627 = vpop.f32.mrb[0].mxu0
      %v628 = vadd.f32 %v467, %v627
      %v629 = vpop.f32.mrb[0].mxu0
      %v630 = vadd.f32 %v467, %v629
      %v631 = vpop.f32.mrb[0].mxu0
      %v632 = vadd.f32 %v472, %v631
      %v633 = vpop.f32.mrb[0].mxu0
      %v634 = vadd.f32 %v472, %v633
      %635 = vmatprep.mubr.bf16.mxu0 0
      %636 = vmatmul.mubr.bf16.gmra.mrb[0].mxu0 %v579
      %v637 = vpop.f32.mrb[0].mxu0
      %v638 = vadd.f32 %v477, %v637
      %v639 = vpop.f32.mrb[0].mxu0
      %v640 = vadd.f32 %v477, %v639
      %v641 = vpop.f32.mrb[0].mxu0
      %v642 = vadd.f32 %v482, %v641
      %v643 = vpop.f32.mrb[0].mxu0
      %v644 = vadd.f32 %v482, %v643
      %645 = vmatprep.mubr.bf16.mxu0 0
      %646 = vmatmul.mubr.bf16.gmra.mrb[0].mxu0 %v582
      %v647 = vpop.f32.mrb[0].mxu0
      %v648 = vadd.f32 %v487, %v647
      %v649 = vpop.f32.mrb[0].mxu0
      %v650 = vadd.f32 %v487, %v649
      %v651 = vpop.f32.mrb[0].mxu0
      %v652 = vadd.f32 %v492, %v651
      %v653 = vpop.f32.mrb[0].mxu0
      %v654 = vadd.f32 %v492, %v653
      %655 = vmatprep.mubr.bf16.mxu0 0
      %656 = vmatmul.mubr.bf16.gmra.mrb[0].mxu0 %v585
      %v657 = vpop.f32.mrb[0].mxu0
      %v658 = vadd.f32 %v497, %v657
      %v659 = vpop.f32.mrb[0].mxu0
      %v660 = vadd.f32 %v497, %v659
      %v661 = vpop.f32.mrb[0].mxu0
      %v662 = vadd.f32 %v502, %v661
      %v663 = vpop.f32.mrb[0].mxu0
      %v664 = vadd.f32 %v502, %v663
      %665 = vmatprep.mubr.bf16.mxu0 0
      %666 = vmatmul.mubr.bf16.gmra.mrb[0].mxu0 %v588
      %v667 = vpop.f32.mrb[0].mxu0
      %v668 = vadd.f32 %v507, %v667
      %v669 = vpop.f32.mrb[0].mxu0
      %v670 = vadd.f32 %v507, %v669
      %v671 = vpop.f32.mrb[0].mxu0
      %v672 = vadd.f32 %v512, %v671
      %v673 = vpop.f32.mrb[0].mxu0
      %v674 = vadd.f32 %v512, %v673
      %675 = vmatprep.mubr.bf16.mxu0 0
      %676 = vmatmul.mubr.bf16.gmra.mrb[0].mxu0 %v591
      %v677 = vpop.f32.mrb[0].mxu0
      %v678 = vadd.f32 %v517, %v677
      %v679 = vpop.f32.mrb[0].mxu0
      %v680 = vadd.f32 %v517, %v679
      %v681 = vpop.f32.mrb[0].mxu0
      %v682 = vadd.f32 %v522, %v681
      %v683 = vpop.f32.mrb[0].mxu0
      %v684 = vadd.f32 %v522, %v683
      %685 = vdwg.mxu0
      %v686 = vld [vmem:[%s3] sm:$0xf]
      %v687 = vld [vmem:[%s3 + $0x4] sm:$0xf]
      %v688 = vld [vmem:[%s3 + $0x8] sm:$0xf]
      %v689 = vld [vmem:[%s3 + $0xc] sm:$0xf]
      %v690 = vld [vmem:[%s3 + $0x10] sm:$0xf]
      %v691 = vld [vmem:[%s3 + $0x14] sm:$0xf]
      %v692 = vld [vmem:[%s3 + $0x18] sm:$0xf]
      %v693 = vld [vmem:[%s3 + $0x1c] sm:$0xf]
      %v694 = vld [vmem:[%s3 + $0x20] sm:$0xf]
      %v695 = vld [vmem:[%s3 + $0x24] sm:$0xf]
      %v696 = vld [vmem:[%s3 + $0x28] sm:$0xf]
      %v697 = vld [vmem:[%s3 + $0x2c] sm:$0xf]
      %v698 = vld [vmem:[%s5] sm:$0xf]
      %v699 = vld [vmem:[%s5 + $0x4] sm:$0xf]
      %v700 = vld [vmem:[%s5 + $0x8] sm:$0xf]
      %v701 = vld [vmem:[%s5 + $0xc] sm:$0xf]
      %v702 = vld [vmem:[%s5 + $0x10] sm:$0xf]
      %v703 = vld [vmem:[%s5 + $0x14] sm:$0xf]
      %v704 = vld [vmem:[%s5 + $0x18] sm:$0xf]
      %v705 = vld [vmem:[%s5 + $0x1c] sm:$0xf]
      %v706 = vld [vmem:[%s6] sm:$0xff]
      %v707 = vld [vmem:[%s6 + $0x8] sm:$0xff]
      %v708 = vld [vmem:[%s6 + $0x10] sm:$0xff]
      %v709 = vld [vmem:[%s6 + $0x18] sm:$0xff]
      %v710 = vld [vmem:[%s6 + $0x20] sm:$0xff]
      %v711 = vld [vmem:[%s6 + $0x28] sm:$0xff]
      %v712 = vld [vmem:[%s6 + $0x30] sm:$0xff]
      %v713 = vld [vmem:[%s6 + $0x38] sm:$0xff]
      %v714 = vld [vmem:[%s7] sm:$0x1]
      loop: start=0, step=1, limit=25
      $region61: #{correlation_forward.2} parent=59 // loop_pre_header
        _
      $region62: #{correlation_forward.2} parent=59 // loop_header
        %s716 = sphi 0, %s720
        %p717 = scmp.ge.s32.totalorder %s716, 25
      $region63: #{correlation_forward.2} parent=59 // loop_header_branch
        %719 = sbr.rel (%p717) target = $region67
      $region64: #{correlation_forward.2} parent=59 // loop_body
        %s721 = smul.u32 %s716, 8
        %s722 = smul.addr %s721, 4
        %s723 = scalar_lea.vmem %s423, %s722
        %v724 = vld [vmem:[%s723] sm:$0xff]
        %v725 = vld [vmem:[%s723 + $0x8] sm:$0xff]
        %v726 = vld [vmem:[%s723 + $0x10] sm:$0xff]
        %v727 = vld [vmem:[%s723 + $0x18] sm:$0xff]
        %v740 = vunpack.c.l.b16 %v686
        %v741 = vunpack.c.l.b16 %v687
        %v742 = vunpack.c.l.b16 %v688
        %v743 = vunpack.c.l.b16 %v689
        %v744 = vunpack.c.l.b16 %v690
        %v745 = vunpack.c.l.b16 %v691
        %v746 = vunpack.c.l.b16 %v692
        %v747 = vunpack.c.l.b16 %v693
        %v748 = vunpack.c.l.b16 %v694
        %v749 = vunpack.c.l.b16 %v695
        %v750 = vunpack.c.l.b16 %v696
        %v751 = vunpack.c.l.b16 %v697
        %v752 = vpack.c.b16 %v741, %v740
        %v753 = vpack.c.b16 %v743, %v742
        %v754 = vpack.c.b16 %v745, %v744
        %v755 = vpack.c.b16 %v747, %v746
        %v756 = vpack.c.b16 %v749, %v748
        %v757 = vpack.c.b16 %v751, %v750
        %v762 = vunpack.c.l.b16 %v724
        %v763 = vunpack.c.h.b16 %v724
        %v764 = vunpack.c.l.b16 %v725
        %v765 = vunpack.c.h.b16 %v725
        %v766 = vunpack.c.l.b16 %v726
        %v767 = vunpack.c.h.b16 %v726
        %v768 = vunpack.c.l.b16 %v727
        %v769 = vunpack.c.h.b16 %v727
        %v770 = vpack.c.b16 %v764, %v762
        %v771 = vpack.c.b16 %v765, %v763
        %v772 = vpack.c.b16 %v768, %v766
        %v773 = vpack.c.b16 %v769, %v767
        %v779 = vsel %vm574, %v752, 0
        %v782 = vsel %vm574, %v753, 0
        %v785 = vsel %vm574, %v754, 0
        %v788 = vsel %vm574, %v755, 0
        %v791 = vsel %vm574, %v756, 0
        %v794 = vsel %vm574, %v757, 0
        %796 = vmatprep.subr.bf16.mxu0 %v771
        %797 = vmatpush1.bf16.msra.mxu0 %v770
        %798 = vmatprep.subr.bf16.mxu0 %v773
        %799 = vmatpush1.bf16.msra.mxu0 %v772
        %800 = vmatprep.subr.bf16.mxu0 0
        %801 = vmatpush1.bf16.msra.mxu0 0
        %802 = vmatprep.subr.bf16.mxu0 0
        %803 = vmatpush1.bf16.msra.mxu0 0
        %804 = vmatprep.subr.bf16.mxu0 0
        %805 = vmatpush1.bf16.msra.mxu0 0
        %806 = vmatprep.subr.bf16.mxu0 0
        %807 = vmatpush1.bf16.msra.mxu0 0
        %808 = vmatprep.subr.bf16.mxu0 0
        %809 = vmatpush1.bf16.msra.mxu0 0
        %810 = vmatprep.subr.bf16.mxu0 0
        %811 = vmatpush1.bf16.msra.mxu0 0
        %812 = vmatprep.subr.bf16.mxu0 0
        %813 = vmatpush1.bf16.msra.mxu0 0
        %814 = vmatprep.subr.bf16.mxu0 0
        %815 = vmatpush1.bf16.msra.mxu0 0
        %816 = vmatprep.subr.bf16.mxu0 0
        %817 = vmatpush1.bf16.msra.mxu0 0
        %818 = vmatprep.subr.bf16.mxu0 0
        %819 = vmatpush1.bf16.msra.mxu0 0
        %820 = vmatprep.subr.bf16.mxu0 0
        %821 = vmatpush1.bf16.msra.mxu0 0
        %822 = vmatprep.subr.bf16.mxu0 0
        %823 = vmatpush1.bf16.msra.mxu0 0
        %824 = vmatprep.subr.bf16.mxu0 0
        %825 = vmatpush1.bf16.msra.mxu0 0
        %826 = vmatprep.subr.bf16.mxu0 0
        %827 = vmatpush1.bf16.msra.mxu0 0
        %828 = vmatprep.mubr.bf16.mxu0 0
        %829 = vmatmul.mubr.bf16.gmra.mrb[0].mxu0 %v779
        %v830 = vpop.f32.mrb[0].mxu0
        %v831 = vadd.f32 %v628, %v830
        %v832 = vpop.f32.mrb[0].mxu0
        %v833 = vadd.f32 %v630, %v832
        %v834 = vpop.f32.mrb[0].mxu0
        %v835 = vadd.f32 %v632, %v834
        %v836 = vpop.f32.mrb[0].mxu0
        %v837 = vadd.f32 %v634, %v836
        %838 = vmatprep.mubr.bf16.mxu0 0
        %839 = vmatmul.mubr.bf16.gmra.mrb[0].mxu0 %v782
        %v840 = vpop.f32.mrb[0].mxu0
        %v841 = vadd.f32 %v638, %v840
        %v842 = vpop.f32.mrb[0].mxu0
        %v843 = vadd.f32 %v640, %v842
        %v844 = vpop.f32.mrb[0].mxu0
        %v845 = vadd.f32 %v642, %v844
        %v846 = vpop.f32.mrb[0].mxu0
        %v847 = vadd.f32 %v644, %v846
        %848 = vmatprep.mubr.bf16.mxu0 0
        %849 = vmatmul.mubr.bf16.gmra.mrb[0].mxu0 %v785
        %v850 = vpop.f32.mrb[0].mxu0
        %v851 = vadd.f32 %v648, %v850
        %v852 = vpop.f32.mrb[0].mxu0
        %v853 = vadd.f32 %v650, %v852
        %v854 = vpop.f32.mrb[0].mxu0
        %v855 = vadd.f32 %v652, %v854
        %v856 = vpop.f32.mrb[0].mxu0
        %v857 = vadd.f32 %v654, %v856
        %858 = vmatprep.mubr.bf16.mxu0 0
        %859 = vmatmul.mubr.bf16.gmra.mrb[0].mxu0 %v788
        %v860 = vpop.f32.mrb[0].mxu0
        %v861 = vadd.f32 %v658, %v860
        %v862 = vpop.f32.mrb[0].mxu0
        %v863 = vadd.f32 %v660, %v862
        %v864 = vpop.f32.mrb[0].mxu0
        %v865 = vadd.f32 %v662, %v864
        %v866 = vpop.f32.mrb[0].mxu0
        %v867 = vadd.f32 %v664, %v866
        %868 = vmatprep.mubr.bf16.mxu0 0
        %869 = vmatmul.mubr.bf16.gmra.mrb[0].mxu0 %v791
        %v870 = vpop.f32.mrb[0].mxu0
        %v871 = vadd.f32 %v668, %v870
        %v872 = vpop.f32.mrb[0].mxu0
        %v873 = vadd.f32 %v670, %v872
        %v874 = vpop.f32.mrb[0].mxu0
        %v875 = vadd.f32 %v672, %v874
        %v876 = vpop.f32.mrb[0].mxu0
        %v877 = vadd.f32 %v674, %v876
        %878 = vmatprep.mubr.bf16.mxu0 0
        %879 = vmatmul.mubr.bf16.gmra.mrb[0].mxu0 %v794
        %v880 = vpop.f32.mrb[0].mxu0
        %v881 = vadd.f32 %v678, %v880
        %v882 = vpop.f32.mrb[0].mxu0
        %v883 = vadd.f32 %v680, %v882
        %v884 = vpop.f32.mrb[0].mxu0
        %v885 = vadd.f32 %v682, %v884
        %v886 = vpop.f32.mrb[0].mxu0
        %v887 = vadd.f32 %v684, %v886
        %888 = vdwg.mxu0
        %v889 = vmax.f32 %v831, 0.0
        %v890 = vmax.f32 %v833, 0.0
        %v891 = vmax.f32 %v835, 0.0
        %v892 = vmax.f32 %v837, 0.0
        %v893 = vmax.f32 %v841, 0.0
        %v894 = vmax.f32 %v843, 0.0
        %v895 = vmax.f32 %v845, 0.0
        %v896 = vmax.f32 %v847, 0.0
        %v897 = vmax.f32 %v851, 0.0
        %v898 = vmax.f32 %v853, 0.0
        %v899 = vmax.f32 %v855, 0.0
        %v900 = vmax.f32 %v857, 0.0
        %v901 = vmax.f32 %v861, 0.0
        %v902 = vmax.f32 %v863, 0.0
        %v903 = vmax.f32 %v865, 0.0
        %v904 = vmax.f32 %v867, 0.0
        %v905 = vmax.f32 %v871, 0.0
        %v906 = vmax.f32 %v873, 0.0
        %v907 = vmax.f32 %v875, 0.0
        %v908 = vmax.f32 %v877, 0.0
        %v909 = vmax.f32 %v881, 0.0
        %v910 = vmax.f32 %v883, 0.0
        %v911 = vmax.f32 %v885, 0.0
        %v912 = vmax.f32 %v887, 0.0
        %v913 = vpack.c.bf16 %v891, %v889
        %v914 = vpack.c.bf16 %v892, %v890
        %v915 = vpack.c.bf16 %v895, %v893
        %v916 = vpack.c.bf16 %v896, %v894
        %v917 = vpack.c.bf16 %v899, %v897
        %v918 = vpack.c.bf16 %v900, %v898
        %v919 = vpack.c.bf16 %v903, %v901
        %v920 = vpack.c.bf16 %v904, %v902
        %v921 = vpack.c.bf16 %v907, %v905
        %v922 = vpack.c.bf16 %v908, %v906
        %v923 = vpack.c.bf16 %v911, %v909
        %v924 = vpack.c.bf16 %v912, %v910
        %926 = vset.pattern.permute.xlu0 0
        %927 = vperm.xlu0 %926, %v706
        %v928 = vpop.permute.xlu0 %927
        %931 = vset.pattern.permute.xlu0 0
        %932 = vperm.xlu0 %931, %v707
        %v933 = vpop.permute.xlu0 %932
        %936 = vset.pattern.permute.xlu0 0
        %937 = vperm.xlu0 %936, %v708
        %v938 = vpop.permute.xlu0 %937
        %941 = vset.pattern.permute.xlu0 0
        %942 = vperm.xlu0 %941, %v709
        %v943 = vpop.permute.xlu0 %942
        %946 = vset.pattern.permute.xlu0 0
        %947 = vperm.xlu0 %946, %v710
        %v948 = vpop.permute.xlu0 %947
        %951 = vset.pattern.permute.xlu0 0
        %952 = vperm.xlu0 %951, %v711
        %v953 = vpop.permute.xlu0 %952
        %956 = vset.pattern.permute.xlu0 0
        %957 = vperm.xlu0 %956, %v712
        %v958 = vpop.permute.xlu0 %957
        %961 = vset.pattern.permute.xlu0 0
        %962 = vperm.xlu0 %961, %v713
        %v963 = vpop.permute.xlu0 %962
        %v973 = vunpack.c.l.b16 %v698
        %v974 = vunpack.c.l.b16 %v699
        %v975 = vunpack.c.l.b16 %v700
        %v976 = vunpack.c.l.b16 %v701
        %v977 = vunpack.c.l.b16 %v702
        %v978 = vunpack.c.l.b16 %v703
        %v979 = vunpack.c.l.b16 %v704
        %v980 = vunpack.c.l.b16 %v705
        %v981 = vpack.c.b16 %v974, %v973
        %v982 = vpack.c.b16 %v976, %v975
        %v983 = vpack.c.b16 %v978, %v977
        %v984 = vpack.c.b16 %v980, %v979
        %vm985 = vcmask 785408
        %v987 = vsel %vm985, %v981, 0
        %v990 = vsel %vm985, %v982, 0
        %v993 = vsel %vm985, %v983, 0
        %v996 = vsel %vm985, %v984, 0
        %998 = vmatprep.subr.bf16.mxu0 %v914
        %999 = vmatpush1.bf16.msra.mxu0 %v913
        %1000 = vmatprep.subr.bf16.mxu0 %v916
        %1001 = vmatpush1.bf16.msra.mxu0 %v915
        %1002 = vmatprep.subr.bf16.mxu0 %v918
        %1003 = vmatpush1.bf16.msra.mxu0 %v917
        %1004 = vmatprep.subr.bf16.mxu0 %v920
        %1005 = vmatpush1.bf16.msra.mxu0 %v919
        %1006 = vmatprep.subr.bf16.mxu0 %v922
        %1007 = vmatpush1.bf16.msra.mxu0 %v921
        %1008 = vmatprep.subr.bf16.mxu0 %v924
        %1009 = vmatpush1.bf16.msra.mxu0 %v923
        %1010 = vmatprep.subr.bf16.mxu0 0
        %1011 = vmatpush1.bf16.msra.mxu0 0
        %1012 = vmatprep.subr.bf16.mxu0 0
        %1013 = vmatpush1.bf16.msra.mxu0 0
        %1014 = vmatprep.subr.bf16.mxu0 0
        %1015 = vmatpush1.bf16.msra.mxu0 0
        %1016 = vmatprep.subr.bf16.mxu0 0
        %1017 = vmatpush1.bf16.msra.mxu0 0
        %1018 = vmatprep.subr.bf16.mxu0 0
        %1019 = vmatpush1.bf16.msra.mxu0 0
        %1020 = vmatprep.subr.bf16.mxu0 0
        %1021 = vmatpush1.bf16.msra.mxu0 0
        %1022 = vmatprep.subr.bf16.mxu0 0
        %1023 = vmatpush1.bf16.msra.mxu0 0
        %1024 = vmatprep.subr.bf16.mxu0 0
        %1025 = vmatpush1.bf16.msra.mxu0 0
        %1026 = vmatprep.subr.bf16.mxu0 0
        %1027 = vmatpush1.bf16.msra.mxu0 0
        %1028 = vmatprep.subr.bf16.mxu0 0
        %1029 = vmatpush1.bf16.msra.mxu0 0
        %1030 = vmatprep.mubr.bf16.mxu0 0
        %1031 = vmatmul.mubr.bf16.gmra.mrb[0].mxu0 %v987
        %v1032 = vpop.f32.mrb[0].mxu0
        %v1033 = vadd.f32 %v928, %v1032
        %v1034 = vpop.f32.mrb[0].mxu0
        %v1035 = vadd.f32 %v928, %v1034
        %v1036 = vpop.f32.mrb[0].mxu0
        %v1037 = vadd.f32 %v933, %v1036
        %v1038 = vpop.f32.mrb[0].mxu0
        %v1039 = vadd.f32 %v933, %v1038
        %1040 = vmatprep.mubr.bf16.mxu0 0
        %1041 = vmatmul.mubr.bf16.gmra.mrb[0].mxu0 %v990
        %v1042 = vpop.f32.mrb[0].mxu0
        %v1043 = vadd.f32 %v938, %v1042
        %v1044 = vpop.f32.mrb[0].mxu0
        %v1045 = vadd.f32 %v938, %v1044
        %v1046 = vpop.f32.mrb[0].mxu0
        %v1047 = vadd.f32 %v943, %v1046
        %v1048 = vpop.f32.mrb[0].mxu0
        %v1049 = vadd.f32 %v943, %v1048
        %1050 = vmatprep.mubr.bf16.mxu0 0
        %1051 = vmatmul.mubr.bf16.gmra.mrb[0].mxu0 %v993
        %v1052 = vpop.f32.mrb[0].mxu0
        %v1053 = vadd.f32 %v948, %v1052
        %v1054 = vpop.f32.mrb[0].mxu0
        %v1055 = vadd.f32 %v948, %v1054
        %v1056 = vpop.f32.mrb[0].mxu0
        %v1057 = vadd.f32 %v953, %v1056
        %v1058 = vpop.f32.mrb[0].mxu0
        %v1059 = vadd.f32 %v953, %v1058
        %1060 = vmatprep.mubr.bf16.mxu0 0
        %1061 = vmatmul.mubr.bf16.gmra.mrb[0].mxu0 %v996
        %v1062 = vpop.f32.mrb[0].mxu0
        %v1063 = vadd.f32 %v958, %v1062
        %v1064 = vpop.f32.mrb[0].mxu0
        %v1065 = vadd.f32 %v958, %v1064
        %v1066 = vpop.f32.mrb[0].mxu0
        %v1067 = vadd.f32 %v963, %v1066
        %v1068 = vpop.f32.mrb[0].mxu0
        %v1069 = vadd.f32 %v963, %v1068
        %1070 = vdwg.mxu0
        %v1071 = vmax.f32 %v1033, 0.0
        %v1072 = vmax.f32 %v1035, 0.0
        %v1073 = vmax.f32 %v1037, 0.0
        %v1074 = vmax.f32 %v1039, 0.0
        %v1075 = vmax.f32 %v1043, 0.0
        %v1076 = vmax.f32 %v1045, 0.0
        %v1077 = vmax.f32 %v1047, 0.0
        %v1078 = vmax.f32 %v1049, 0.0
        %v1079 = vmax.f32 %v1053, 0.0
        %v1080 = vmax.f32 %v1055, 0.0
        %v1081 = vmax.f32 %v1057, 0.0
        %v1082 = vmax.f32 %v1059, 0.0
        %v1083 = vmax.f32 %v1063, 0.0
        %v1084 = vmax.f32 %v1065, 0.0
        %v1085 = vmax.f32 %v1067, 0.0
        %v1086 = vmax.f32 %v1069, 0.0
        %v1087 = vpack.c.bf16 %v1073, %v1071
        %v1088 = vpack.c.bf16 %v1074, %v1072
        %v1089 = vpack.c.bf16 %v1077, %v1075
        %v1090 = vpack.c.bf16 %v1078, %v1076
        %v1091 = vpack.c.bf16 %v1081, %v1079
        %v1092 = vpack.c.bf16 %v1082, %v1080
        %v1093 = vpack.c.bf16 %v1085, %v1083
        %v1094 = vpack.c.bf16 %v1086, %v1084
        %vm1095 = vcmask 523264
        %v1097 = vsel %vm1095, %v714, 0
        %1099 = vmatprep.subr.bf16.mxu0 %v1088
        %1100 = vmatpush1.bf16.msra.mxu0 %v1087
        %1101 = vmatprep.subr.bf16.mxu0 %v1090
        %1102 = vmatpush1.bf16.msra.mxu0 %v1089
        %1103 = vmatprep.subr.bf16.mxu0 %v1092
        %1104 = vmatpush1.bf16.msra.mxu0 %v1091
        %1105 = vmatprep.subr.bf16.mxu0 %v1094
        %1106 = vmatpush1.bf16.msra.mxu0 %v1093
        %1107 = vmatprep.subr.bf16.mxu0 0
        %1108 = vmatpush1.bf16.msra.mxu0 0
        %1109 = vmatprep.subr.bf16.mxu0 0
        %1110 = vmatpush1.bf16.msra.mxu0 0
        %1111 = vmatprep.subr.bf16.mxu0 0
        %1112 = vmatpush1.bf16.msra.mxu0 0
        %1113 = vmatprep.subr.bf16.mxu0 0
        %1114 = vmatpush1.bf16.msra.mxu0 0
        %1115 = vmatprep.subr.bf16.mxu0 0
        %1116 = vmatpush1.bf16.msra.mxu0 0
        %1117 = vmatprep.subr.bf16.mxu0 0
        %1118 = vmatpush1.bf16.msra.mxu0 0
        %1119 = vmatprep.subr.bf16.mxu0 0
        %1120 = vmatpush1.bf16.msra.mxu0 0
        %1121 = vmatprep.subr.bf16.mxu0 0
        %1122 = vmatpush1.bf16.msra.mxu0 0
        %1123 = vmatprep.subr.bf16.mxu0 0
        %1124 = vmatpush1.bf16.msra.mxu0 0
        %1125 = vmatprep.subr.bf16.mxu0 0
        %1126 = vmatpush1.bf16.msra.mxu0 0
        %1127 = vmatprep.subr.bf16.mxu0 0
        %1128 = vmatpush1.bf16.msra.mxu0 0
        %1129 = vmatprep.subr.bf16.mxu0 0
        %1130 = vmatpush1.bf16.msra.mxu0 0
        %1131 = vmatprep.mubr.bf16.mxu0 0
        %1132 = vmatmul.mubr.bf16.gmra.mrb[0].mxu0 %v1097
        %v1133 = vpop.f32.mrb[0].mxu0
        %v1134 = vadd.f32 0.0, %v1133
        %v1135 = vpop.f32.mrb[0].mxu0
        %v1136 = vadd.f32 0.0, %v1135
        %v1137 = vpop.f32.mrb[0].mxu0
        %v1138 = vpop.f32.mrb[0].mxu0
        %1139 = vdwg.mxu0
        %v1142 = vcombine.low %v1134, %v1136
        %v1144 = vunpack.c.l.s4 1966171168
        %v1145 = vunpack.c.0.s8 %v1144
        %v1146 = vlaneseq
        %v1147 = vshrl.u32 %v1146, 7
        %v1148 = vsub.s32 %v1145, %v1147
        %v1149 = vrot.slane %v1142, %v1148
        %v1151 = vunpack.c.l.s4 1966171168
        %v1152 = vunpack.c.0.s8 %v1151
        %v1153 = vlaneseq
        %v1154 = vshrl.u32 %v1153, 7
        %v1155 = vsub.s32 %v1152, %v1154
        %v1156 = vrot.slane %v1149, %v1155
        %v1158 = vlaneseq
        %vm1159 = vcmp.ge.s32.totalorder %v1158, 0
        %vm1160 = vcmp.lt.s32.totalorder %v1158, 256
        %vm1161 = vmand %vm1159, %vm1160
        %s1162 = sshra.s32 %s716, 3
        %s1163 = sand.u32 %s716, 7
        %s1164 = sshra.s32 %s716, 3
        %s1165 = sand.u32 %s716, 7
        %s1166 = smul.u32 %s1162, 2
        %s1167 = smul.u32 %s1166, 8
        %s1168 = sadd.s32 %s1167, %s1165
        %s1169 = scalar_lea.vmem [#allocation2], %s1168
        %1170 = vst.msk [vmem:[%s1169] ss:$8 sm:$0x3] %vm1161, %v1156
        %1171 = vst.msk [vmem:[%s1169] ss:$8 sm:$0x0] %vm1161, %v1156
      $region65: #{correlation_forward.2} parent=59 // loop_footer
        %s720 = sadd.s32 1, %s716
      $region66: #{correlation_forward.2} parent=59 // loop_footer_branch
        %715 = sbr.rel target = $region62
      $region67: #{correlation_forward.2} parent=59 // loop_exit
        _
      %v1172 = vld [vmem:[%s8] sm:$0xff]
      %v1173 = vld [vmem:[%s8 + $0x8] sm:$0xff]
      %v1174 = vld [vmem:[%s8 + $0x10] sm:$0xff]
      %v1175 = vld [vmem:[%s8 + $0x18] sm:$0x1]
      %v1176 = vld [vmem:[#allocation2] sm:$0xff]
      %v1177 = vld [vmem:[#allocation2 + $0x8] sm:$0xff]
      %v1178 = vld [vmem:[#allocation2 + $0x10] sm:$0xff]
      %v1179 = vld [vmem:[#allocation2 + $0x18] sm:$0xff]
      %v1180 = vld [vmem:[#allocation2 + $0x20] sm:$0xff]
      %v1181 = vld [vmem:[#allocation2 + $0x28] sm:$0xff]
      %v1182 = vld [vmem:[#allocation2 + $0x30] sm:$0x1]
      %v1183 = vld [vmem:[#allocation2 + $0x38] sm:$0x1]
      %v1184 = vld [vmem:[%s9] sm:$0xff]
      %v1185 = vld [vmem:[%s9 + $0x8] sm:$0xff]
      %v1186 = vld [vmem:[%s9 + $0x10] sm:$0xff]
      %v1187 = vld [vmem:[%s9 + $0x18] sm:$0x1]
      %1189 = vset.pattern.permute.xlu0 0
      %1190 = vperm.xlu0 %1189, %v1184
      %v1191 = vpop.permute.xlu0 %1190
      %1194 = vset.pattern.permute.xlu0 0
      %1195 = vperm.xlu0 %1194, %v1185
      %v1196 = vpop.permute.xlu0 %1195
      %1199 = vset.pattern.permute.xlu0 0
      %1200 = vperm.xlu0 %1199, %v1186
      %v1201 = vpop.permute.xlu0 %1200
      %1204 = vset.pattern.permute.xlu0 0
      %1205 = vperm.xlu0 %1204, %v1187
      %v1206 = vpop.permute.xlu0 %1205
      %vm1208 = vcmask 203776
      %v1210 = vsel %vm1208, %v1172, 0
      %v1213 = vsel %vm1208, %v1173, 0
      %v1216 = vsel %vm1208, %v1174, 0
      %v1219 = vsel %vm1208, %v1175, 0
      %vm1221 = vcmask 1040384
      %v1223 = vsel %vm1221, %v1182, 0
      %v1226 = vsel %vm1221, %v1183, 0
      %1228 = vmatprep.subr.mxu0 %v1177
      %1229 = vmatpush1.msra.mxu0 %v1176
      %1230 = vmatprep.subr.mxu0 %v1179
      %1231 = vmatpush1.msra.mxu0 %v1178
      %1232 = vmatprep.subr.mxu0 %v1181
      %1233 = vmatpush1.msra.mxu0 %v1180
      %1234 = vmatprep.subr.mxu0 %v1226
      %1235 = vmatpush1.msra.mxu0 %v1223
      %1236 = vmatprep.subr.mxu0 0.0
      %1237 = vmatpush1.msra.mxu0 0.0
      %1238 = vmatprep.subr.mxu0 0.0
      %1239 = vmatpush1.msra.mxu0 0.0
      %1240 = vmatprep.subr.mxu0 0.0
      %1241 = vmatpush1.msra.mxu0 0.0
      %1242 = vmatprep.subr.mxu0 0.0
      %1243 = vmatpush1.msra.mxu0 0.0
      %1244 = vmatprep.subr.mxu0 0.0
      %1245 = vmatpush1.msra.mxu0 0.0
      %1246 = vmatprep.subr.mxu0 0.0
      %1247 = vmatpush1.msra.mxu0 0.0
      %1248 = vmatprep.subr.mxu0 0.0
      %1249 = vmatpush1.msra.mxu0 0.0
      %1250 = vmatprep.subr.mxu0 0.0
      %1251 = vmatpush1.msra.mxu0 0.0
      %1252 = vmatprep.subr.mxu0 0.0
      %1253 = vmatpush1.msra.mxu0 0.0
      %1254 = vmatprep.subr.mxu0 0.0
      %1255 = vmatpush1.msra.mxu0 0.0
      %1256 = vmatprep.subr.mxu0 0.0
      %1257 = vmatpush1.msra.mxu0 0.0
      %1258 = vmatprep.subr.mxu0 0.0
      %1259 = vmatpush1.msra.mxu0 0.0
      %1260 = vmatprep.subr.mxu0 0.0
      %1261 = vmatpush1.msra.mxu0 0.0
      %1262 = vmatprep.subr.mxu0 0.0
      %1263 = vmatpush1.msra.mxu0 0.0
      %1264 = vmatprep.subr.mxu0 0.0
      %1265 = vmatpush1.msra.mxu0 0.0
      %1266 = vmatprep.subr.mxu0 0.0
      %1267 = vmatpush1.msra.mxu0 0.0
      %1268 = vmatprep.subr.mxu0 0.0
      %1269 = vmatpush1.msra.mxu0 0.0
      %1270 = vmatprep.subr.mxu0 0.0
      %1271 = vmatpush1.msra.mxu0 0.0
      %1272 = vmatprep.subr.mxu0 0.0
      %1273 = vmatpush1.msra.mxu0 0.0
      %1274 = vmatprep.subr.mxu0 0.0
      %1275 = vmatpush1.msra.mxu0 0.0
      %1276 = vmatprep.subr.mxu0 0.0
      %1277 = vmatpush1.msra.mxu0 0.0
      %1278 = vmatprep.subr.mxu0 0.0
      %1279 = vmatpush1.msra.mxu0 0.0
      %1280 = vmatprep.subr.mxu0 0.0
      %1281 = vmatpush1.msra.mxu0 0.0
      %1282 = vmatprep.subr.mxu0 0.0
      %1283 = vmatpush1.msra.mxu0 0.0
      %1284 = vmatprep.subr.mxu0 0.0
      %1285 = vmatpush1.msra.mxu0 0.0
      %1286 = vmatprep.subr.mxu0 0.0
      %1287 = vmatpush1.msra.mxu0 0.0
      %1288 = vmatprep.subr.mxu0 0.0
      %1289 = vmatpush1.msra.mxu0 0.0
      %1290 = vmatprep.subr.mxu0 0.0
      %1291 = vmatpush1.msra.mxu0 0.0
      %1292 = vmatprep.mubr.f32.mxu0 0.0
      %1293 = vmatmul.mubr.f32.gmra.mrb[0].mxu0 %v1210
      %v1294 = vpop.f32.mrb[0].mxu0
      %v1295 = vadd.f32 %v1191, %v1294
      %v1296 = vpop.f32.mrb[0].mxu0
      %v1297 = vadd.f32 %v1191, %v1296
      %1298 = vmatprep.mubr.f32.mxu0 0.0
      %1299 = vmatmul.mubr.f32.gmra.mrb[0].mxu0 %v1213
      %v1300 = vpop.f32.mrb[0].mxu0
      %v1301 = vadd.f32 %v1196, %v1300
      %v1302 = vpop.f32.mrb[0].mxu0
      %v1303 = vadd.f32 %v1196, %v1302
      %1304 = vmatprep.mubr.f32.mxu0 0.0
      %1305 = vmatmul.mubr.f32.gmra.mrb[0].mxu0 %v1216
      %v1306 = vpop.f32.mrb[0].mxu0
      %v1307 = vadd.f32 %v1201, %v1306
      %v1308 = vpop.f32.mrb[0].mxu0
      %v1309 = vadd.f32 %v1201, %v1308
      %1310 = vmatprep.mubr.f32.mxu0 0.0
      %1311 = vmatmul.mubr.f32.gmra.mrb[0].mxu0 %v1219
      %v1312 = vpop.f32.mrb[0].mxu0
      %v1313 = vadd.f32 %v1206, %v1312
      %v1314 = vpop.f32.mrb[0].mxu0
      %v1315 = vadd.f32 %v1206, %v1314
      %1316 = vdwg.mxu0
      %1317 = vst [vmem:[%s433] sm:$0xff] %v1295
      %1318 = vst [vmem:[%s433 + $0x8] sm:$0xff] %v1297
      %1319 = vst [vmem:[%s433 + $0x10] sm:$0xff] %v1301
      %1320 = vst [vmem:[%s433 + $0x18] sm:$0xff] %v1303
      %1321 = vst [vmem:[%s433 + $0x20] sm:$0xff] %v1307
      %1322 = vst [vmem:[%s433 + $0x28] sm:$0xff] %v1309
      %1323 = vst [vmem:[%s433 + $0x30] sm:$0x1] %v1313
      %1324 = vst [vmem:[%s433 + $0x38] sm:$0x1] %v1315
      %s1325 = smul.u32 2, %s26
      %p1326 = scmp.lt.s32.totalorder %s25, 1
      %s1327 = scalar_select %p1326, %s25, 1
      %p1328 = scmp.lt.s32.totalorder %s1325, 1
      %s1329 = scalar_select %p1328, %s1325, 1
      %s1330 = smul.addr %s1327, 8
      %s1331 = sadd.s32 %s1329, %s1330
      %s1332 = smul.addr %s1331, 8
      %s1333 = scalar_lea.vmem %s10, %s1332
      // Predicated region
      $region68: #{correlation_forward.2} parent=59 // pred_check
        %p1334 = pneg %p277
      $region69: #{correlation_forward.2} parent=59 // pred_check_branch
        %1336 = sbr.rel (%p1334) target = $region71
      $region70: #{correlation_forward.2} parent=59 // pred_region
        %s1337 = smul.u32 2, %s26
      $region71: #{correlation_forward.2} parent=59 // pred_fallthru
        _
    $region60: #{correlation_forward.2} parent=5 // pred_fallthru
      _
    %p1338 = scmp.le.s32.totalorder 2, %s16
    // Predicated region
    $region72: #{correlation_forward.2} parent=5 // pred_check
      %p1339 = pneg %p1338
    $region73: #{correlation_forward.2} parent=5 // pred_check_branch
      %1341 = sbr.rel (%p1339) target = $region75
    $region74: #{correlation_forward.2} parent=5 // pred_region
      %s1342 = ssub.s32 %s16, 2
      // Predicated region
      $region76: #{correlation_forward.2} parent=74 // pred_check
        %p1343 = pneg %p283
      $region77: #{correlation_forward.2} parent=74 // pred_check_branch
        %1345 = sbr.rel (%p1343) target = $region79
      $region78: #{correlation_forward.2} parent=74 // pred_region
        %s1346 = smul.u32 2, %s28
        %p1347 = scmp.lt.s32.totalorder %s27, 1
        %s1348 = scalar_select %p1347, %s27, 1
        %p1349 = scmp.lt.s32.totalorder %s1346, 1
        %s1350 = scalar_select %p1349, %s1346, 1
        %s1351 = smul.addr %s1348, 8
        %s1352 = sadd.s32 %s1350, %s1351
        %s1353 = smul.addr %s1352, 8
        %s1354 = scalar_lea.vmem %s10, %s1353
      $region79: #{correlation_forward.2} parent=74 // pred_fallthru
        _
    $region75: #{correlation_forward.2} parent=5 // pred_fallthru
      _
  $region6: #{correlation_forward.2} parent=0 // loop_footer
    %s20 = sadd.s32 1, %s16
  $region7: #{correlation_forward.2} parent=0 // loop_footer_branch
    %15 = sbr.rel target = $region3
  $region8: #{correlation_forward.2} parent=0 // loop_exit
    _

</llo_original>
